<compile_context>
chip_gen: v5e
topology: v5e:2x2
jax: 0.10.0
libtpu: 0.0.40
codegen_flags: <defaults>
</compile_context>

<pallas_src>
import numpy as np
import jax
import jax.numpy as jnp
from jax.experimental import pallas as pl
from jax.experimental.pallas import tpu as pltpu


# ---------------------------------------------------------------------------
# Fused kernel: Linear+ReLU -> repeat over seq -> 2-layer LSTM (unrolled,
# register-resident state, merged recurrent matmul, step-0 peeled) ->
# conv tail as a lane-dense matmul accumulated per step, with w_big DMA
# overlapped with the recurrence.
# ---------------------------------------------------------------------------
def _fused_decoder_kernel(x_ref, wl_ref, bl_ref,
                          wih0_ref, b0_ref, wrec_ref,
                          wih1_ref, b1_ref,
                          wbig_hbm_ref, bbig_ref,
                          out_ref,
                          wbig_vmem, dma_sem):
    H = wih0_ref.shape[0]                 # hidden size
    T = wbig_hbm_ref.shape[0] // H        # sequence length
    B = x_ref.shape[0]
    bf16 = jnp.bfloat16

    # Kick off the w_big HBM->VMEM DMA immediately; it is only needed by the
    # conv-tail dots, so it hides behind the serial recurrence front-end.
    wbig_cp = pltpu.make_async_copy(wbig_hbm_ref, wbig_vmem, dma_sem)
    wbig_cp.start()

    # Linear + ReLU  -> (B, H)   (bf16 MXU operands, f32 accumulate/elementwise)
    xr = jnp.maximum(
        jnp.dot(x_ref[...].astype(bf16), wl_ref[...],
                preferred_element_type=jnp.float32) + bl_ref[...], 0.0)

    # Layer-0 input-gate contribution.  The LSTM input is x repeated seq_len
    # times, so this (and its bias) is constant across timesteps -> hoisted.
    xg0 = jnp.dot(xr.astype(bf16), wih0_ref[...],
                  preferred_element_type=jnp.float32) + b0_ref[...]

    wrec = wrec_ref[...]                  # (2H, 8H) block-diag [[Whh0,0],[0,Whh1]] bf16
    wih1 = wih1_ref[...]                  # (H, 4H) bf16
    b1 = b1_ref[...]                      # (1, 4H) f32

    def sigmoid(v):
        # exp -> approx vrcp: both EUP ops, no full-precision divide sequence.
        return pl.reciprocal(1.0 + jnp.exp(-v), approx=True)

    def cell(gates, c_prev):
        # Gate columns pre-reordered offline to [i, f, o, g].  Activations are
        # computed over the full (B, 4H) vreg width (EUP cost is per-vreg) and
        # sliced afterwards.
        sig = sigmoid(gates)
        th = jnp.tanh(gates)
        i = sig[:, :H]
        f = sig[:, H:2 * H]
        o = sig[:, 2 * H:3 * H]
        g = th[:, 3 * H:]
        c_new = f * c_prev + i * g
        h_new = o * jnp.tanh(c_new)
        return h_new, c_new

    zeros = jnp.zeros((B, H), jnp.float32)

    # ---- step 0 peeled: h0 = h1 = 0, so skip the recurrent matmul and the
    # ---- lane-concatenate entirely.
    h0, c0 = cell(xg0, zeros)
    g1 = jnp.dot(h0.astype(bf16), wih1, preferred_element_type=jnp.float32) + b1
    h1, c1 = cell(g1, zeros)

    # First use of w_big: wait as late as possible (DMA overlapped above).
    wbig_cp.wait()

    # Conv tail accumulator: y[b, o*T + t], lane-dense (padded to 768 wide).
    y = jnp.dot(h1.astype(bf16), wbig_vmem[0:H, :],
                preferred_element_type=jnp.float32)

    for s in range(1, T):                 # static trip count -> fully unrolled
        # Single merged MXU issue for both layers' recurrent contributions.
        rec = jnp.dot(jnp.concatenate([h0, h1], axis=1).astype(bf16), wrec,
                      preferred_element_type=jnp.float32)        # (B, 8H)
        h0, c0 = cell(xg0 + rec[:, :4 * H], c0)
        g1 = (jnp.dot(h0.astype(bf16), wih1, preferred_element_type=jnp.float32)
              + rec[:, 4 * H:] + b1)
        h1, c1 = cell(g1, c1)

        # Conv1d (with the PyTorch raw-reshape on both sides) folded into
        # w_big: timestep s contributes rows [s*H, (s+1)*H).  Off the serial
        # critical path -> overlaps with the recurrence (MRB-friendly on v7x).
        y = y + jnp.dot(h1.astype(bf16), wbig_vmem[s * H:(s + 1) * H, :],
                        preferred_element_type=jnp.float32)

    out_ref[...] = (y + bbig_ref[...]).astype(out_ref.dtype)


# ---------------------------------------------------------------------------
# Host-side parameter preparation (done once, outside the hot path)
# ---------------------------------------------------------------------------
def prepare_params(params, seq_len):
    H = params["w_lin"].shape[1]
    T = seq_len

    def reorder(w):                       # gate columns [i, f, g, o] -> [i, f, o, g]
        i, f, g, o = jnp.split(w, 4, axis=-1)
        return jnp.concatenate([i, f, o, g], axis=-1)

    whh0 = reorder(params["w_hh0"])
    whh1 = reorder(params["w_hh1"])
    z = jnp.zeros((H, 4 * H), jnp.float32)
    w_rec = jnp.concatenate(
        [jnp.concatenate([whh0, z], axis=1),
         jnp.concatenate([z, whh1], axis=1)], axis=0)            # (2H, 8H)

    # Fold: raw reshape (B,T,H)->(B,H,T), Conv1d(k=3, pad=1) along T, and the
    # final raw reshape (B,87,T)->(B,T,87) into one (T*H, T*Cout) matrix:
    #   out_flat[b, o*T + t] = sum_{c,k} w_conv[k,o,c] * lstm_flat[b, c*T + t + k - 1]
    w_conv = params["w_conv"]                                    # (3, Cout, Cin)
    K, Cout, Cin = w_conv.shape
    ti = jnp.arange(T)[:, None]                                  # conv-input time
    to = jnp.arange(T)[None, :]                                  # conv-output time
    kk = ti - to + 1                                             # tap index
    valid = ((kk >= 0) & (kk < K)).astype(w_conv.dtype)
    g = w_conv[jnp.clip(kk, 0, K - 1)] * valid[:, :, None, None]  # (T, T, Cout, Cin)
    w_big = jnp.transpose(g, (3, 0, 2, 1)).reshape(Cin * T, Cout * T)
    b_big = jnp.repeat(params["b_conv"].reshape(-1), T)[None, :]  # (1, Cout*T)

    # Pad output lane width to the next multiple of 128 (696 -> 768) so every
    # output store is an unmasked, lane-dense vst.
    c_valid = Cout * T
    c_pad = ((c_valid + 127) // 128) * 128
    w_big = jnp.pad(w_big, ((0, 0), (0, c_pad - c_valid)))
    b_big = jnp.pad(b_big, ((0, 0), (0, c_pad - c_valid)))

    bf16 = jnp.bfloat16
    return dict(
        w_lin=params["w_lin"].astype(bf16), b_lin=params["b_lin"],
        w_ih0=reorder(params["w_ih0"]).astype(bf16), b_0=reorder(params["b_0"]),
        w_rec=w_rec.astype(bf16),
        w_ih1=reorder(params["w_ih1"]).astype(bf16), b_1=reorder(params["b_1"]),
        w_big=w_big.astype(bf16), b_big=b_big,
        c_valid=c_valid,
    )


# ---------------------------------------------------------------------------
# Wrapper: single gridless pallas_call + slice + free contiguous reshape
# ---------------------------------------------------------------------------
def vae_single_dancer_decoder(x, kparams, seq_len):
    B = x.shape[0]
    C = 29 * 3
    T = seq_len
    w_big = kparams["w_big"]
    c_pad = w_big.shape[1]

    vmem = pl.BlockSpec(memory_space=pltpu.MemorySpace.VMEM)
    any_spec = pl.BlockSpec(memory_space=pl.ANY)      # w_big: manual DMA inside

    out2d = pl.pallas_call(
        _fused_decoder_kernel,
        out_shape=jax.ShapeDtypeStruct((B, c_pad), jnp.float32),
        in_specs=[vmem] * 8 + [any_spec, vmem],
        out_specs=vmem,
        scratch_shapes=[
            pltpu.VMEM(w_big.shape, w_big.dtype),      # w_big double-home in VMEM
            pltpu.SemaphoreType.DMA,                   # its DMA completion sem
        ],
    )(x, kparams["w_lin"], kparams["b_lin"],
      kparams["w_ih0"], kparams["b_0"], kparams["w_rec"],
      kparams["w_ih1"], kparams["b_1"],
      w_big, kparams["b_big"])

    # Drop the lane padding, then a contiguous row-major reshape only (free):
    # (B, T*87) -> (B, T, 87), matching the PyTorch raw-reshape semantics.
    return out2d[:, :T * C].reshape(B, T, C)


# ---------------------------------------------------------------------------
# Deterministic synthetic parameter init (PyTorch-like uniform bounds),
# kept in "raw PyTorch layout" (gate order [i, f, g, o]).
# ---------------------------------------------------------------------------
def init_params(key, latent_dim, n_units):
    H = n_units
    C = 29 * 3
    ks = jax.random.split(key, 12)

    def u(k, shape, fan):
        bound = 1.0 / np.sqrt(fan)
        return jax.random.uniform(k, shape, jnp.float32, -bound, bound)

    return dict(
        w_lin=u(ks[0], (latent_dim, H), latent_dim),
        b_lin=u(ks[1], (1, H), latent_dim),
        w_ih0=u(ks[2], (H, 4 * H), H),
        w_hh0=u(ks[3], (H, 4 * H), H),
        b_0=u(ks[4], (1, 4 * H), H) + u(ks[5], (1, 4 * H), H),   # b_ih_l0 + b_hh_l0
        w_ih1=u(ks[6], (H, 4 * H), H),
        w_hh1=u(ks[7], (H, 4 * H), H),
        b_1=u(ks[8], (1, 4 * H), H) + u(ks[9], (1, 4 * H), H),   # b_ih_l1 + b_hh_l1
        w_conv=u(ks[10], (3, C, H), H * 3),                      # (kernel, out_ch, in_ch)
        b_conv=u(ks[11], (C, 1), H * 3),
    )


# ---------------------------------------------------------------------------
# Pure-JAX f32 reference (same semantics as the PyTorch forward).  Reference
# matmuls pinned to precision="highest" so the kernel's bf16 operands are
# compared against a true f32 baseline.
# ---------------------------------------------------------------------------
def reference_forward(x, params, seq_len):
    B = x.shape[0]
    H = params["w_lin"].shape[1]
    T = seq_len
    C = 29 * 3
    hp = jax.lax.Precision.HIGHEST

    def mm(a, b):
        return jnp.dot(a, b, precision=hp)

    xr = jnp.maximum(mm(x, params["w_lin"]) + params["b_lin"], 0.0)

    def cell(gates, c):
        i = jax.nn.sigmoid(gates[:, :H])
        f = jax.nn.sigmoid(gates[:, H:2 * H])
        g = jnp.tanh(gates[:, 2 * H:3 * H])
        o = jax.nn.sigmoid(gates[:, 3 * H:])
        c_new = f * c + i * g
        return o * jnp.tanh(c_new), c_new

    h0 = c0 = h1 = c1 = jnp.zeros((B, H), jnp.float32)
    outs = []
    for _ in range(T):
        g0 = mm(xr, params["w_ih0"]) + params["b_0"] + mm(h0, params["w_hh0"])
        h0, c0 = cell(g0, c0)
        g1 = mm(h0, params["w_ih1"]) + params["b_1"] + mm(h1, params["w_hh1"])
        h1, c1 = cell(g1, c1)
        outs.append(h1)
    lstm_out = jnp.stack(outs, axis=1)                 # (B, T, H)
    conv_in = jnp.reshape(lstm_out, (B, H, T))         # PyTorch raw reshape
    pad = jnp.pad(conv_in, ((0, 0), (0, 0), (1, 1)))
    out = jnp.zeros((B, C, T), jnp.float32)
    for k in range(3):
        out = out + jnp.einsum("oc,bct->bot", params["w_conv"][k],
                               pad[:, :, k:k + T], precision=hp)
    out = out + params["b_conv"][None]
    return jnp.reshape(out, (B, T, C))                 # PyTorch raw reshape


if __name__ == "__main__":
    latent_dim, n_units, seq_len, B = 16, 32, 8, 2
    key = jax.random.PRNGKey(0)
    kx, kp = jax.random.split(key)
    x = jax.random.normal(kx, (B, latent_dim), jnp.float32)

    params = init_params(kp, latent_dim, n_units)
    kparams = prepare_params(params, seq_len)          # one-time host-side prep

    out = vae_single_dancer_decoder(x, kparams, seq_len)
    out = jax.block_until_ready(out)
    assert out.shape == (B, seq_len, 29 * 3)

    ref = reference_forward(x, params, seq_len)
    # Tolerance loosened from 2e-3 (f32 path) to 2e-2 to cover bf16 MXU
    # operands + approx-reciprocal sigmoid compounding over 8 recurrent steps.
    np.testing.assert_allclose(np.asarray(out), np.asarray(ref), atol=2e-2, rtol=2e-2)
    print("KERNEL_OK")
</pallas_src>

<mosaic_0001>
module attributes {stable_mosaic.version = 11 : i64} {
  func.func @_fused_decoder_kernel(%arg0: memref<2x16xf32, #tpu.memory_space<vmem>>, %arg1: memref<16x32xbf16, #tpu.memory_space<vmem>>, %arg2: memref<1x32xf32, #tpu.memory_space<vmem>>, %arg3: memref<32x128xbf16, #tpu.memory_space<vmem>>, %arg4: memref<1x128xf32, #tpu.memory_space<vmem>>, %arg5: memref<64x256xbf16, #tpu.memory_space<vmem>>, %arg6: memref<32x128xbf16, #tpu.memory_space<vmem>>, %arg7: memref<1x128xf32, #tpu.memory_space<vmem>>, %arg8: memref<256x768xbf16, #tpu.memory_space<any>>, %arg9: memref<1x768xf32, #tpu.memory_space<vmem>>, %arg10: memref<2x768xf32, #tpu.memory_space<vmem>>, %arg11: memref<256x768xbf16, #tpu.memory_space<vmem>>, %arg12: memref<!tpu.dma_semaphore, #tpu.memory_space<semaphore_mem>>) attributes {dimension_semantics = [], scalar_prefetch = 0 : i64, scratch_operands = 2 : i64, tpu.core_type = #tpu.core_type<tc>} {
    tpu.enqueue_dma source(%arg8 : memref<256x768xbf16, #tpu.memory_space<any>>) target(%arg11 : memref<256x768xbf16, #tpu.memory_space<vmem>>) target_semaphore(%arg12 : memref<!tpu.dma_semaphore, #tpu.memory_space<semaphore_mem>>)
    %c0 = arith.constant 0 : index
    %c0_0 = arith.constant 0 : index
    %0 = vector.load %arg0[%c0, %c0_0] : memref<2x16xf32, #tpu.memory_space<vmem>>, vector<2x16xf32>
    %1 = arith.truncf %0 : vector<2x16xf32> to vector<2x16xbf16>
    %c0_1 = arith.constant 0 : index
    %c0_2 = arith.constant 0 : index
    %2 = vector.load %arg1[%c0_1, %c0_2] : memref<16x32xbf16, #tpu.memory_space<vmem>>, vector<16x32xbf16>
    %cst = arith.constant dense<0.000000e+00> : vector<2x32xf32>
    %3 = tpu.matmul %1, %2, %cst {dimension_numbers = #tpu.dot_dimension_numbers<[1], [0], [0], [1], [0, 0, 1, 1], [], []>} : vector<2x16xbf16>, vector<16x32xbf16>, vector<2x32xf32> -> vector<2x32xf32>
    %c0_3 = arith.constant 0 : index
    %c0_4 = arith.constant 0 : index
    %4 = vector.load %arg2[%c0_3, %c0_4] : memref<1x32xf32, #tpu.memory_space<vmem>>, vector<1x32xf32>
    %5 = vector.broadcast %4 : vector<1x32xf32> to vector<2x32xf32>
    %6 = arith.addf %3, %5 : vector<2x32xf32>
    %cst_5 = arith.constant 0.000000e+00 : f32
    %7 = vector.broadcast %cst_5 : f32 to vector<2x32xf32>
    %8 = arith.maximumf %6, %7 : vector<2x32xf32>
    %9 = arith.truncf %8 : vector<2x32xf32> to vector<2x32xbf16>
    %c0_6 = arith.constant 0 : index
    %c0_7 = arith.constant 0 : index
    %10 = vector.load %arg3[%c0_6, %c0_7] : memref<32x128xbf16, #tpu.memory_space<vmem>>, vector<32x128xbf16>
    %cst_8 = arith.constant dense<0.000000e+00> : vector<2x128xf32>
    %11 = tpu.matmul %9, %10, %cst_8 {dimension_numbers = #tpu.dot_dimension_numbers<[1], [0], [0], [1], [0, 0, 1, 1], [], []>} : vector<2x32xbf16>, vector<32x128xbf16>, vector<2x128xf32> -> vector<2x128xf32>
    %c0_9 = arith.constant 0 : index
    %c0_10 = arith.constant 0 : index
    %12 = vector.load %arg4[%c0_9, %c0_10] : memref<1x128xf32, #tpu.memory_space<vmem>>, vector<1x128xf32>
    %13 = vector.broadcast %12 : vector<1x128xf32> to vector<2x128xf32>
    %14 = arith.addf %11, %13 : vector<2x128xf32>
    %c0_11 = arith.constant 0 : index
    %c0_12 = arith.constant 0 : index
    %15 = vector.load %arg5[%c0_11, %c0_12] : memref<64x256xbf16, #tpu.memory_space<vmem>>, vector<64x256xbf16>
    %c0_13 = arith.constant 0 : index
    %c0_14 = arith.constant 0 : index
    %16 = vector.load %arg6[%c0_13, %c0_14] : memref<32x128xbf16, #tpu.memory_space<vmem>>, vector<32x128xbf16>
    %c0_15 = arith.constant 0 : index
    %c0_16 = arith.constant 0 : index
    %17 = vector.load %arg7[%c0_15, %c0_16] : memref<1x128xf32, #tpu.memory_space<vmem>>, vector<1x128xf32>
    %cst_17 = arith.constant 0.000000e+00 : f32
    %18 = vector.broadcast %cst_17 : f32 to vector<2x32xf32>
    %cst_18 = arith.constant 0.000000e+00 : f32
    %19 = vector.broadcast %cst_18 : f32 to vector<2x128xf32>
    %20 = arith.subf %19, %14 : vector<2x128xf32>
    %21 = math.exp %20 : vector<2x128xf32>
    %cst_19 = arith.constant 1.000000e+00 : f32
    %22 = vector.broadcast %cst_19 : f32 to vector<2x128xf32>
    %23 = arith.addf %22, %21 : vector<2x128xf32>
    %24 = tpu.reciprocal %23 {approx = true} : vector<2x128xf32> -> vector<2x128xf32>
    %25 = math.tanh %14 : vector<2x128xf32>
    %26 = vector.extract_strided_slice %24 {offsets = [0, 0], sizes = [2, 32], strides = [1, 1]} : vector<2x128xf32> to vector<2x32xf32>
    %27 = vector.extract_strided_slice %24 {offsets = [0, 32], sizes = [2, 32], strides = [1, 1]} : vector<2x128xf32> to vector<2x32xf32>
    %28 = vector.extract_strided_slice %24 {offsets = [0, 64], sizes = [2, 32], strides = [1, 1]} : vector<2x128xf32> to vector<2x32xf32>
    %29 = vector.extract_strided_slice %25 {offsets = [0, 96], sizes = [2, 32], strides = [1, 1]} : vector<2x128xf32> to vector<2x32xf32>
    %30 = arith.mulf %27, %18 : vector<2x32xf32>
    %31 = arith.mulf %26, %29 : vector<2x32xf32>
    %32 = arith.addf %30, %31 : vector<2x32xf32>
    %33 = math.tanh %32 : vector<2x32xf32>
    %34 = arith.mulf %28, %33 : vector<2x32xf32>
    %35 = arith.truncf %34 : vector<2x32xf32> to vector<2x32xbf16>
    %cst_20 = arith.constant dense<0.000000e+00> : vector<2x128xf32>
    %36 = tpu.matmul %35, %16, %cst_20 {dimension_numbers = #tpu.dot_dimension_numbers<[1], [0], [0], [1], [0, 0, 1, 1], [], []>} : vector<2x32xbf16>, vector<32x128xbf16>, vector<2x128xf32> -> vector<2x128xf32>
    %37 = vector.broadcast %17 : vector<1x128xf32> to vector<2x128xf32>
    %38 = arith.addf %36, %37 : vector<2x128xf32>
    %cst_21 = arith.constant 0.000000e+00 : f32
    %39 = vector.broadcast %cst_21 : f32 to vector<2x128xf32>
    %40 = arith.subf %39, %38 : vector<2x128xf32>
    %41 = math.exp %40 : vector<2x128xf32>
    %cst_22 = arith.constant 1.000000e+00 : f32
    %42 = vector.broadcast %cst_22 : f32 to vector<2x128xf32>
    %43 = arith.addf %42, %41 : vector<2x128xf32>
    %44 = tpu.reciprocal %43 {approx = true} : vector<2x128xf32> -> vector<2x128xf32>
    %45 = math.tanh %38 : vector<2x128xf32>
    %46 = vector.extract_strided_slice %44 {offsets = [0, 0], sizes = [2, 32], strides = [1, 1]} : vector<2x128xf32> to vector<2x32xf32>
    %47 = vector.extract_strided_slice %44 {offsets = [0, 32], sizes = [2, 32], strides = [1, 1]} : vector<2x128xf32> to vector<2x32xf32>
    %48 = vector.extract_strided_slice %44 {offsets = [0, 64], sizes = [2, 32], strides = [1, 1]} : vector<2x128xf32> to vector<2x32xf32>
    %49 = vector.extract_strided_slice %45 {offsets = [0, 96], sizes = [2, 32], strides = [1, 1]} : vector<2x128xf32> to vector<2x32xf32>
    %50 = arith.mulf %47, %18 : vector<2x32xf32>
    %51 = arith.mulf %46, %49 : vector<2x32xf32>
    %52 = arith.addf %50, %51 : vector<2x32xf32>
    %53 = math.tanh %52 : vector<2x32xf32>
    %54 = arith.mulf %48, %53 : vector<2x32xf32>
    tpu.wait_dma2 semaphore(%arg12 : memref<!tpu.dma_semaphore, #tpu.memory_space<semaphore_mem>>) src(%arg8 : memref<256x768xbf16, #tpu.memory_space<any>>) dst(%arg11 : memref<256x768xbf16, #tpu.memory_space<vmem>>)
    %55 = arith.truncf %54 : vector<2x32xf32> to vector<2x32xbf16>
    %c0_23 = arith.constant 0 : index
    %c0_24 = arith.constant 0 : index
    %56 = vector.load %arg11[%c0_23, %c0_24] : memref<256x768xbf16, #tpu.memory_space<vmem>>, vector<32x768xbf16>
    %cst_25 = arith.constant dense<0.000000e+00> : vector<2x768xf32>
    %57 = tpu.matmul %55, %56, %cst_25 {dimension_numbers = #tpu.dot_dimension_numbers<[1], [0], [0], [1], [0, 0, 1, 1], [], []>} : vector<2x32xbf16>, vector<32x768xbf16>, vector<2x768xf32> -> vector<2x768xf32>
    %58 = tpu.concatenate %34, %54 in 1 : vector<2x32xf32>, vector<2x32xf32> -> vector<2x64xf32>
    %59 = arith.truncf %58 : vector<2x64xf32> to vector<2x64xbf16>
    %cst_26 = arith.constant dense<0.000000e+00> : vector<2x256xf32>
    %60 = tpu.matmul %59, %15, %cst_26 {dimension_numbers = #tpu.dot_dimension_numbers<[1], [0], [0], [1], [0, 0, 1, 1], [], []>} : vector<2x64xbf16>, vector<64x256xbf16>, vector<2x256xf32> -> vector<2x256xf32>
    %61 = vector.extract_strided_slice %60 {offsets = [0, 0], sizes = [2, 128], strides = [1, 1]} : vector<2x256xf32> to vector<2x128xf32>
    %62 = arith.addf %14, %61 : vector<2x128xf32>
    %cst_27 = arith.constant 0.000000e+00 : f32
    %63 = vector.broadcast %cst_27 : f32 to vector<2x128xf32>
    %64 = arith.subf %63, %62 : vector<2x128xf32>
    %65 = math.exp %64 : vector<2x128xf32>
    %cst_28 = arith.constant 1.000000e+00 : f32
    %66 = vector.broadcast %cst_28 : f32 to vector<2x128xf32>
    %67 = arith.addf %66, %65 : vector<2x128xf32>
    %68 = tpu.reciprocal %67 {approx = true} : vector<2x128xf32> -> vector<2x128xf32>
    %69 = math.tanh %62 : vector<2x128xf32>
    %70 = vector.extract_strided_slice %68 {offsets = [0, 0], sizes = [2, 32], strides = [1, 1]} : vector<2x128xf32> to vector<2x32xf32>
    %71 = vector.extract_strided_slice %68 {offsets = [0, 32], sizes = [2, 32], strides = [1, 1]} : vector<2x128xf32> to vector<2x32xf32>
    %72 = vector.extract_strided_slice %68 {offsets = [0, 64], sizes = [2, 32], strides = [1, 1]} : vector<2x128xf32> to vector<2x32xf32>
    %73 = vector.extract_strided_slice %69 {offsets = [0, 96], sizes = [2, 32], strides = [1, 1]} : vector<2x128xf32> to vector<2x32xf32>
    %74 = arith.mulf %71, %32 : vector<2x32xf32>
    %75 = arith.mulf %70, %73 : vector<2x32xf32>
    %76 = arith.addf %74, %75 : vector<2x32xf32>
    %77 = math.tanh %76 : vector<2x32xf32>
    %78 = arith.mulf %72, %77 : vector<2x32xf32>
    %79 = arith.truncf %78 : vector<2x32xf32> to vector<2x32xbf16>
    %cst_29 = arith.constant dense<0.000000e+00> : vector<2x128xf32>
    %80 = tpu.matmul %79, %16, %cst_29 {dimension_numbers = #tpu.dot_dimension_numbers<[1], [0], [0], [1], [0, 0, 1, 1], [], []>} : vector<2x32xbf16>, vector<32x128xbf16>, vector<2x128xf32> -> vector<2x128xf32>
    %81 = vector.extract_strided_slice %60 {offsets = [0, 128], sizes = [2, 128], strides = [1, 1]} : vector<2x256xf32> to vector<2x128xf32>
    %82 = arith.addf %80, %81 : vector<2x128xf32>
    %83 = vector.broadcast %17 : vector<1x128xf32> to vector<2x128xf32>
    %84 = arith.addf %82, %83 : vector<2x128xf32>
    %cst_30 = arith.constant 0.000000e+00 : f32
    %85 = vector.broadcast %cst_30 : f32 to vector<2x128xf32>
    %86 = arith.subf %85, %84 : vector<2x128xf32>
    %87 = math.exp %86 : vector<2x128xf32>
    %cst_31 = arith.constant 1.000000e+00 : f32
    %88 = vector.broadcast %cst_31 : f32 to vector<2x128xf32>
    %89 = arith.addf %88, %87 : vector<2x128xf32>
    %90 = tpu.reciprocal %89 {approx = true} : vector<2x128xf32> -> vector<2x128xf32>
    %91 = math.tanh %84 : vector<2x128xf32>
    %92 = vector.extract_strided_slice %90 {offsets = [0, 0], sizes = [2, 32], strides = [1, 1]} : vector<2x128xf32> to vector<2x32xf32>
    %93 = vector.extract_strided_slice %90 {offsets = [0, 32], sizes = [2, 32], strides = [1, 1]} : vector<2x128xf32> to vector<2x32xf32>
    %94 = vector.extract_strided_slice %90 {offsets = [0, 64], sizes = [2, 32], strides = [1, 1]} : vector<2x128xf32> to vector<2x32xf32>
    %95 = vector.extract_strided_slice %91 {offsets = [0, 96], sizes = [2, 32], strides = [1, 1]} : vector<2x128xf32> to vector<2x32xf32>
    %96 = arith.mulf %93, %52 : vector<2x32xf32>
    %97 = arith.mulf %92, %95 : vector<2x32xf32>
    %98 = arith.addf %96, %97 : vector<2x32xf32>
    %99 = math.tanh %98 : vector<2x32xf32>
    %100 = arith.mulf %94, %99 : vector<2x32xf32>
    %101 = arith.truncf %100 : vector<2x32xf32> to vector<2x32xbf16>
    %c32 = arith.constant 32 : index
    %c0_32 = arith.constant 0 : index
    %102 = vector.load %arg11[%c32, %c0_32] : memref<256x768xbf16, #tpu.memory_space<vmem>>, vector<32x768xbf16>
    %cst_33 = arith.constant dense<0.000000e+00> : vector<2x768xf32>
    %103 = tpu.matmul %101, %102, %cst_33 {dimension_numbers = #tpu.dot_dimension_numbers<[1], [0], [0], [1], [0, 0, 1, 1], [], []>} : vector<2x32xbf16>, vector<32x768xbf16>, vector<2x768xf32> -> vector<2x768xf32>
    %104 = arith.addf %57, %103 : vector<2x768xf32>
    %105 = tpu.concatenate %78, %100 in 1 : vector<2x32xf32>, vector<2x32xf32> -> vector<2x64xf32>
    %106 = arith.truncf %105 : vector<2x64xf32> to vector<2x64xbf16>
    %cst_34 = arith.constant dense<0.000000e+00> : vector<2x256xf32>
    %107 = tpu.matmul %106, %15, %cst_34 {dimension_numbers = #tpu.dot_dimension_numbers<[1], [0], [0], [1], [0, 0, 1, 1], [], []>} : vector<2x64xbf16>, vector<64x256xbf16>, vector<2x256xf32> -> vector<2x256xf32>
    %108 = vector.extract_strided_slice %107 {offsets = [0, 0], sizes = [2, 128], strides = [1, 1]} : vector<2x256xf32> to vector<2x128xf32>
    %109 = arith.addf %14, %108 : vector<2x128xf32>
    %cst_35 = arith.constant 0.000000e+00 : f32
    %110 = vector.broadcast %cst_35 : f32 to vector<2x128xf32>
    %111 = arith.subf %110, %109 : vector<2x128xf32>
    %112 = math.exp %111 : vector<2x128xf32>
    %cst_36 = arith.constant 1.000000e+00 : f32
    %113 = vector.broadcast %cst_36 : f32 to vector<2x128xf32>
    %114 = arith.addf %113, %112 : vector<2x128xf32>
    %115 = tpu.reciprocal %114 {approx = true} : vector<2x128xf32> -> vector<2x128xf32>
    %116 = math.tanh %109 : vector<2x128xf32>
    %117 = vector.extract_strided_slice %115 {offsets = [0, 0], sizes = [2, 32], strides = [1, 1]} : vector<2x128xf32> to vector<2x32xf32>
    %118 = vector.extract_strided_slice %115 {offsets = [0, 32], sizes = [2, 32], strides = [1, 1]} : vector<2x128xf32> to vector<2x32xf32>
    %119 = vector.extract_strided_slice %115 {offsets = [0, 64], sizes = [2, 32], strides = [1, 1]} : vector<2x128xf32> to vector<2x32xf32>
    %120 = vector.extract_strided_slice %116 {offsets = [0, 96], sizes = [2, 32], strides = [1, 1]} : vector<2x128xf32> to vector<2x32xf32>
    %121 = arith.mulf %118, %76 : vector<2x32xf32>
    %122 = arith.mulf %117, %120 : vector<2x32xf32>
    %123 = arith.addf %121, %122 : vector<2x32xf32>
    %124 = math.tanh %123 : vector<2x32xf32>
    %125 = arith.mulf %119, %124 : vector<2x32xf32>
    %126 = arith.truncf %125 : vector<2x32xf32> to vector<2x32xbf16>
    %cst_37 = arith.constant dense<0.000000e+00> : vector<2x128xf32>
    %127 = tpu.matmul %126, %16, %cst_37 {dimension_numbers = #tpu.dot_dimension_numbers<[1], [0], [0], [1], [0, 0, 1, 1], [], []>} : vector<2x32xbf16>, vector<32x128xbf16>, vector<2x128xf32> -> vector<2x128xf32>
    %128 = vector.extract_strided_slice %107 {offsets = [0, 128], sizes = [2, 128], strides = [1, 1]} : vector<2x256xf32> to vector<2x128xf32>
    %129 = arith.addf %127, %128 : vector<2x128xf32>
    %130 = vector.broadcast %17 : vector<1x128xf32> to vector<2x128xf32>
    %131 = arith.addf %129, %130 : vector<2x128xf32>
    %cst_38 = arith.constant 0.000000e+00 : f32
    %132 = vector.broadcast %cst_38 : f32 to vector<2x128xf32>
    %133 = arith.subf %132, %131 : vector<2x128xf32>
    %134 = math.exp %133 : vector<2x128xf32>
    %cst_39 = arith.constant 1.000000e+00 : f32
    %135 = vector.broadcast %cst_39 : f32 to vector<2x128xf32>
    %136 = arith.addf %135, %134 : vector<2x128xf32>
    %137 = tpu.reciprocal %136 {approx = true} : vector<2x128xf32> -> vector<2x128xf32>
    %138 = math.tanh %131 : vector<2x128xf32>
    %139 = vector.extract_strided_slice %137 {offsets = [0, 0], sizes = [2, 32], strides = [1, 1]} : vector<2x128xf32> to vector<2x32xf32>
    %140 = vector.extract_strided_slice %137 {offsets = [0, 32], sizes = [2, 32], strides = [1, 1]} : vector<2x128xf32> to vector<2x32xf32>
    %141 = vector.extract_strided_slice %137 {offsets = [0, 64], sizes = [2, 32], strides = [1, 1]} : vector<2x128xf32> to vector<2x32xf32>
    %142 = vector.extract_strided_slice %138 {offsets = [0, 96], sizes = [2, 32], strides = [1, 1]} : vector<2x128xf32> to vector<2x32xf32>
    %143 = arith.mulf %140, %98 : vector<2x32xf32>
    %144 = arith.mulf %139, %142 : vector<2x32xf32>
    %145 = arith.addf %143, %144 : vector<2x32xf32>
    %146 = math.tanh %145 : vector<2x32xf32>
    %147 = arith.mulf %141, %146 : vector<2x32xf32>
    %148 = arith.truncf %147 : vector<2x32xf32> to vector<2x32xbf16>
    %c64 = arith.constant 64 : index
    %c0_40 = arith.constant 0 : index
    %149 = vector.load %arg11[%c64, %c0_40] : memref<256x768xbf16, #tpu.memory_space<vmem>>, vector<32x768xbf16>
    %cst_41 = arith.constant dense<0.000000e+00> : vector<2x768xf32>
    %150 = tpu.matmul %148, %149, %cst_41 {dimension_numbers = #tpu.dot_dimension_numbers<[1], [0], [0], [1], [0, 0, 1, 1], [], []>} : vector<2x32xbf16>, vector<32x768xbf16>, vector<2x768xf32> -> vector<2x768xf32>
    %151 = arith.addf %104, %150 : vector<2x768xf32>
    %152 = tpu.concatenate %125, %147 in 1 : vector<2x32xf32>, vector<2x32xf32> -> vector<2x64xf32>
    %153 = arith.truncf %152 : vector<2x64xf32> to vector<2x64xbf16>
    %cst_42 = arith.constant dense<0.000000e+00> : vector<2x256xf32>
    %154 = tpu.matmul %153, %15, %cst_42 {dimension_numbers = #tpu.dot_dimension_numbers<[1], [0], [0], [1], [0, 0, 1, 1], [], []>} : vector<2x64xbf16>, vector<64x256xbf16>, vector<2x256xf32> -> vector<2x256xf32>
    %155 = vector.extract_strided_slice %154 {offsets = [0, 0], sizes = [2, 128], strides = [1, 1]} : vector<2x256xf32> to vector<2x128xf32>
    %156 = arith.addf %14, %155 : vector<2x128xf32>
    %cst_43 = arith.constant 0.000000e+00 : f32
    %157 = vector.broadcast %cst_43 : f32 to vector<2x128xf32>
    %158 = arith.subf %157, %156 : vector<2x128xf32>
    %159 = math.exp %158 : vector<2x128xf32>
    %cst_44 = arith.constant 1.000000e+00 : f32
    %160 = vector.broadcast %cst_44 : f32 to vector<2x128xf32>
    %161 = arith.addf %160, %159 : vector<2x128xf32>
    %162 = tpu.reciprocal %161 {approx = true} : vector<2x128xf32> -> vector<2x128xf32>
    %163 = math.tanh %156 : vector<2x128xf32>
    %164 = vector.extract_strided_slice %162 {offsets = [0, 0], sizes = [2, 32], strides = [1, 1]} : vector<2x128xf32> to vector<2x32xf32>
    %165 = vector.extract_strided_slice %162 {offsets = [0, 32], sizes = [2, 32], strides = [1, 1]} : vector<2x128xf32> to vector<2x32xf32>
    %166 = vector.extract_strided_slice %162 {offsets = [0, 64], sizes = [2, 32], strides = [1, 1]} : vector<2x128xf32> to vector<2x32xf32>
    %167 = vector.extract_strided_slice %163 {offsets = [0, 96], sizes = [2, 32], strides = [1, 1]} : vector<2x128xf32> to vector<2x32xf32>
    %168 = arith.mulf %165, %123 : vector<2x32xf32>
    %169 = arith.mulf %164, %167 : vector<2x32xf32>
    %170 = arith.addf %168, %169 : vector<2x32xf32>
    %171 = math.tanh %170 : vector<2x32xf32>
    %172 = arith.mulf %166, %171 : vector<2x32xf32>
    %173 = arith.truncf %172 : vector<2x32xf32> to vector<2x32xbf16>
    %cst_45 = arith.constant dense<0.000000e+00> : vector<2x128xf32>
    %174 = tpu.matmul %173, %16, %cst_45 {dimension_numbers = #tpu.dot_dimension_numbers<[1], [0], [0], [1], [0, 0, 1, 1], [], []>} : vector<2x32xbf16>, vector<32x128xbf16>, vector<2x128xf32> -> vector<2x128xf32>
    %175 = vector.extract_strided_slice %154 {offsets = [0, 128], sizes = [2, 128], strides = [1, 1]} : vector<2x256xf32> to vector<2x128xf32>
    %176 = arith.addf %174, %175 : vector<2x128xf32>
    %177 = vector.broadcast %17 : vector<1x128xf32> to vector<2x128xf32>
    %178 = arith.addf %176, %177 : vector<2x128xf32>
    %cst_46 = arith.constant 0.000000e+00 : f32
    %179 = vector.broadcast %cst_46 : f32 to vector<2x128xf32>
    %180 = arith.subf %179, %178 : vector<2x128xf32>
    %181 = math.exp %180 : vector<2x128xf32>
    %cst_47 = arith.constant 1.000000e+00 : f32
    %182 = vector.broadcast %cst_47 : f32 to vector<2x128xf32>
    %183 = arith.addf %182, %181 : vector<2x128xf32>
    %184 = tpu.reciprocal %183 {approx = true} : vector<2x128xf32> -> vector<2x128xf32>
    %185 = math.tanh %178 : vector<2x128xf32>
    %186 = vector.extract_strided_slice %184 {offsets = [0, 0], sizes = [2, 32], strides = [1, 1]} : vector<2x128xf32> to vector<2x32xf32>
    %187 = vector.extract_strided_slice %184 {offsets = [0, 32], sizes = [2, 32], strides = [1, 1]} : vector<2x128xf32> to vector<2x32xf32>
    %188 = vector.extract_strided_slice %184 {offsets = [0, 64], sizes = [2, 32], strides = [1, 1]} : vector<2x128xf32> to vector<2x32xf32>
    %189 = vector.extract_strided_slice %185 {offsets = [0, 96], sizes = [2, 32], strides = [1, 1]} : vector<2x128xf32> to vector<2x32xf32>
    %190 = arith.mulf %187, %145 : vector<2x32xf32>
    %191 = arith.mulf %186, %189 : vector<2x32xf32>
    %192 = arith.addf %190, %191 : vector<2x32xf32>
    %193 = math.tanh %192 : vector<2x32xf32>
    %194 = arith.mulf %188, %193 : vector<2x32xf32>
    %195 = arith.truncf %194 : vector<2x32xf32> to vector<2x32xbf16>
    %c96 = arith.constant 96 : index
    %c0_48 = arith.constant 0 : index
    %196 = vector.load %arg11[%c96, %c0_48] : memref<256x768xbf16, #tpu.memory_space<vmem>>, vector<32x768xbf16>
    %cst_49 = arith.constant dense<0.000000e+00> : vector<2x768xf32>
    %197 = tpu.matmul %195, %196, %cst_49 {dimension_numbers = #tpu.dot_dimension_numbers<[1], [0], [0], [1], [0, 0, 1, 1], [], []>} : vector<2x32xbf16>, vector<32x768xbf16>, vector<2x768xf32> -> vector<2x768xf32>
    %198 = arith.addf %151, %197 : vector<2x768xf32>
    %199 = tpu.concatenate %172, %194 in 1 : vector<2x32xf32>, vector<2x32xf32> -> vector<2x64xf32>
    %200 = arith.truncf %199 : vector<2x64xf32> to vector<2x64xbf16>
    %cst_50 = arith.constant dense<0.000000e+00> : vector<2x256xf32>
    %201 = tpu.matmul %200, %15, %cst_50 {dimension_numbers = #tpu.dot_dimension_numbers<[1], [0], [0], [1], [0, 0, 1, 1], [], []>} : vector<2x64xbf16>, vector<64x256xbf16>, vector<2x256xf32> -> vector<2x256xf32>
    %202 = vector.extract_strided_slice %201 {offsets = [0, 0], sizes = [2, 128], strides = [1, 1]} : vector<2x256xf32> to vector<2x128xf32>
    %203 = arith.addf %14, %202 : vector<2x128xf32>
    %cst_51 = arith.constant 0.000000e+00 : f32
    %204 = vector.broadcast %cst_51 : f32 to vector<2x128xf32>
    %205 = arith.subf %204, %203 : vector<2x128xf32>
    %206 = math.exp %205 : vector<2x128xf32>
    %cst_52 = arith.constant 1.000000e+00 : f32
    %207 = vector.broadcast %cst_52 : f32 to vector<2x128xf32>
    %208 = arith.addf %207, %206 : vector<2x128xf32>
    %209 = tpu.reciprocal %208 {approx = true} : vector<2x128xf32> -> vector<2x128xf32>
    %210 = math.tanh %203 : vector<2x128xf32>
    %211 = vector.extract_strided_slice %209 {offsets = [0, 0], sizes = [2, 32], strides = [1, 1]} : vector<2x128xf32> to vector<2x32xf32>
    %212 = vector.extract_strided_slice %209 {offsets = [0, 32], sizes = [2, 32], strides = [1, 1]} : vector<2x128xf32> to vector<2x32xf32>
    %213 = vector.extract_strided_slice %209 {offsets = [0, 64], sizes = [2, 32], strides = [1, 1]} : vector<2x128xf32> to vector<2x32xf32>
    %214 = vector.extract_strided_slice %210 {offsets = [0, 96], sizes = [2, 32], strides = [1, 1]} : vector<2x128xf32> to vector<2x32xf32>
    %215 = arith.mulf %212, %170 : vector<2x32xf32>
    %216 = arith.mulf %211, %214 : vector<2x32xf32>
    %217 = arith.addf %215, %216 : vector<2x32xf32>
    %218 = math.tanh %217 : vector<2x32xf32>
    %219 = arith.mulf %213, %218 : vector<2x32xf32>
    %220 = arith.truncf %219 : vector<2x32xf32> to vector<2x32xbf16>
    %cst_53 = arith.constant dense<0.000000e+00> : vector<2x128xf32>
    %221 = tpu.matmul %220, %16, %cst_53 {dimension_numbers = #tpu.dot_dimension_numbers<[1], [0], [0], [1], [0, 0, 1, 1], [], []>} : vector<2x32xbf16>, vector<32x128xbf16>, vector<2x128xf32> -> vector<2x128xf32>
    %222 = vector.extract_strided_slice %201 {offsets = [0, 128], sizes = [2, 128], strides = [1, 1]} : vector<2x256xf32> to vector<2x128xf32>
    %223 = arith.addf %221, %222 : vector<2x128xf32>
    %224 = vector.broadcast %17 : vector<1x128xf32> to vector<2x128xf32>
    %225 = arith.addf %223, %224 : vector<2x128xf32>
    %cst_54 = arith.constant 0.000000e+00 : f32
    %226 = vector.broadcast %cst_54 : f32 to vector<2x128xf32>
    %227 = arith.subf %226, %225 : vector<2x128xf32>
    %228 = math.exp %227 : vector<2x128xf32>
    %cst_55 = arith.constant 1.000000e+00 : f32
    %229 = vector.broadcast %cst_55 : f32 to vector<2x128xf32>
    %230 = arith.addf %229, %228 : vector<2x128xf32>
    %231 = tpu.reciprocal %230 {approx = true} : vector<2x128xf32> -> vector<2x128xf32>
    %232 = math.tanh %225 : vector<2x128xf32>
    %233 = vector.extract_strided_slice %231 {offsets = [0, 0], sizes = [2, 32], strides = [1, 1]} : vector<2x128xf32> to vector<2x32xf32>
    %234 = vector.extract_strided_slice %231 {offsets = [0, 32], sizes = [2, 32], strides = [1, 1]} : vector<2x128xf32> to vector<2x32xf32>
    %235 = vector.extract_strided_slice %231 {offsets = [0, 64], sizes = [2, 32], strides = [1, 1]} : vector<2x128xf32> to vector<2x32xf32>
    %236 = vector.extract_strided_slice %232 {offsets = [0, 96], sizes = [2, 32], strides = [1, 1]} : vector<2x128xf32> to vector<2x32xf32>
    %237 = arith.mulf %234, %192 : vector<2x32xf32>
    %238 = arith.mulf %233, %236 : vector<2x32xf32>
    %239 = arith.addf %237, %238 : vector<2x32xf32>
    %240 = math.tanh %239 : vector<2x32xf32>
    %241 = arith.mulf %235, %240 : vector<2x32xf32>
    %242 = arith.truncf %241 : vector<2x32xf32> to vector<2x32xbf16>
    %c128 = arith.constant 128 : index
    %c0_56 = arith.constant 0 : index
    %243 = vector.load %arg11[%c128, %c0_56] : memref<256x768xbf16, #tpu.memory_space<vmem>>, vector<32x768xbf16>
    %cst_57 = arith.constant dense<0.000000e+00> : vector<2x768xf32>
    %244 = tpu.matmul %242, %243, %cst_57 {dimension_numbers = #tpu.dot_dimension_numbers<[1], [0], [0], [1], [0, 0, 1, 1], [], []>} : vector<2x32xbf16>, vector<32x768xbf16>, vector<2x768xf32> -> vector<2x768xf32>
    %245 = arith.addf %198, %244 : vector<2x768xf32>
    %246 = tpu.concatenate %219, %241 in 1 : vector<2x32xf32>, vector<2x32xf32> -> vector<2x64xf32>
    %247 = arith.truncf %246 : vector<2x64xf32> to vector<2x64xbf16>
    %cst_58 = arith.constant dense<0.000000e+00> : vector<2x256xf32>
    %248 = tpu.matmul %247, %15, %cst_58 {dimension_numbers = #tpu.dot_dimension_numbers<[1], [0], [0], [1], [0, 0, 1, 1], [], []>} : vector<2x64xbf16>, vector<64x256xbf16>, vector<2x256xf32> -> vector<2x256xf32>
    %249 = vector.extract_strided_slice %248 {offsets = [0, 0], sizes = [2, 128], strides = [1, 1]} : vector<2x256xf32> to vector<2x128xf32>
    %250 = arith.addf %14, %249 : vector<2x128xf32>
    %cst_59 = arith.constant 0.000000e+00 : f32
    %251 = vector.broadcast %cst_59 : f32 to vector<2x128xf32>
    %252 = arith.subf %251, %250 : vector<2x128xf32>
    %253 = math.exp %252 : vector<2x128xf32>
    %cst_60 = arith.constant 1.000000e+00 : f32
    %254 = vector.broadcast %cst_60 : f32 to vector<2x128xf32>
    %255 = arith.addf %254, %253 : vector<2x128xf32>
    %256 = tpu.reciprocal %255 {approx = true} : vector<2x128xf32> -> vector<2x128xf32>
    %257 = math.tanh %250 : vector<2x128xf32>
    %258 = vector.extract_strided_slice %256 {offsets = [0, 0], sizes = [2, 32], strides = [1, 1]} : vector<2x128xf32> to vector<2x32xf32>
    %259 = vector.extract_strided_slice %256 {offsets = [0, 32], sizes = [2, 32], strides = [1, 1]} : vector<2x128xf32> to vector<2x32xf32>
    %260 = vector.extract_strided_slice %256 {offsets = [0, 64], sizes = [2, 32], strides = [1, 1]} : vector<2x128xf32> to vector<2x32xf32>
    %261 = vector.extract_strided_slice %257 {offsets = [0, 96], sizes = [2, 32], strides = [1, 1]} : vector<2x128xf32> to vector<2x32xf32>
    %262 = arith.mulf %259, %217 : vector<2x32xf32>
    %263 = arith.mulf %258, %261 : vector<2x32xf32>
    %264 = arith.addf %262, %263 : vector<2x32xf32>
    %265 = math.tanh %264 : vector<2x32xf32>
    %266 = arith.mulf %260, %265 : vector<2x32xf32>
    %267 = arith.truncf %266 : vector<2x32xf32> to vector<2x32xbf16>
    %cst_61 = arith.constant dense<0.000000e+00> : vector<2x128xf32>
    %268 = tpu.matmul %267, %16, %cst_61 {dimension_numbers = #tpu.dot_dimension_numbers<[1], [0], [0], [1], [0, 0, 1, 1], [], []>} : vector<2x32xbf16>, vector<32x128xbf16>, vector<2x128xf32> -> vector<2x128xf32>
    %269 = vector.extract_strided_slice %248 {offsets = [0, 128], sizes = [2, 128], strides = [1, 1]} : vector<2x256xf32> to vector<2x128xf32>
    %270 = arith.addf %268, %269 : vector<2x128xf32>
    %271 = vector.broadcast %17 : vector<1x128xf32> to vector<2x128xf32>
    %272 = arith.addf %270, %271 : vector<2x128xf32>
    %cst_62 = arith.constant 0.000000e+00 : f32
    %273 = vector.broadcast %cst_62 : f32 to vector<2x128xf32>
    %274 = arith.subf %273, %272 : vector<2x128xf32>
    %275 = math.exp %274 : vector<2x128xf32>
    %cst_63 = arith.constant 1.000000e+00 : f32
    %276 = vector.broadcast %cst_63 : f32 to vector<2x128xf32>
    %277 = arith.addf %276, %275 : vector<2x128xf32>
    %278 = tpu.reciprocal %277 {approx = true} : vector<2x128xf32> -> vector<2x128xf32>
    %279 = math.tanh %272 : vector<2x128xf32>
    %280 = vector.extract_strided_slice %278 {offsets = [0, 0], sizes = [2, 32], strides = [1, 1]} : vector<2x128xf32> to vector<2x32xf32>
    %281 = vector.extract_strided_slice %278 {offsets = [0, 32], sizes = [2, 32], strides = [1, 1]} : vector<2x128xf32> to vector<2x32xf32>
    %282 = vector.extract_strided_slice %278 {offsets = [0, 64], sizes = [2, 32], strides = [1, 1]} : vector<2x128xf32> to vector<2x32xf32>
    %283 = vector.extract_strided_slice %279 {offsets = [0, 96], sizes = [2, 32], strides = [1, 1]} : vector<2x128xf32> to vector<2x32xf32>
    %284 = arith.mulf %281, %239 : vector<2x32xf32>
    %285 = arith.mulf %280, %283 : vector<2x32xf32>
    %286 = arith.addf %284, %285 : vector<2x32xf32>
    %287 = math.tanh %286 : vector<2x32xf32>
    %288 = arith.mulf %282, %287 : vector<2x32xf32>
    %289 = arith.truncf %288 : vector<2x32xf32> to vector<2x32xbf16>
    %c160 = arith.constant 160 : index
    %c0_64 = arith.constant 0 : index
    %290 = vector.load %arg11[%c160, %c0_64] : memref<256x768xbf16, #tpu.memory_space<vmem>>, vector<32x768xbf16>
    %cst_65 = arith.constant dense<0.000000e+00> : vector<2x768xf32>
    %291 = tpu.matmul %289, %290, %cst_65 {dimension_numbers = #tpu.dot_dimension_numbers<[1], [0], [0], [1], [0, 0, 1, 1], [], []>} : vector<2x32xbf16>, vector<32x768xbf16>, vector<2x768xf32> -> vector<2x768xf32>
    %292 = arith.addf %245, %291 : vector<2x768xf32>
    %293 = tpu.concatenate %266, %288 in 1 : vector<2x32xf32>, vector<2x32xf32> -> vector<2x64xf32>
    %294 = arith.truncf %293 : vector<2x64xf32> to vector<2x64xbf16>
    %cst_66 = arith.constant dense<0.000000e+00> : vector<2x256xf32>
    %295 = tpu.matmul %294, %15, %cst_66 {dimension_numbers = #tpu.dot_dimension_numbers<[1], [0], [0], [1], [0, 0, 1, 1], [], []>} : vector<2x64xbf16>, vector<64x256xbf16>, vector<2x256xf32> -> vector<2x256xf32>
    %296 = vector.extract_strided_slice %295 {offsets = [0, 0], sizes = [2, 128], strides = [1, 1]} : vector<2x256xf32> to vector<2x128xf32>
    %297 = arith.addf %14, %296 : vector<2x128xf32>
    %cst_67 = arith.constant 0.000000e+00 : f32
    %298 = vector.broadcast %cst_67 : f32 to vector<2x128xf32>
    %299 = arith.subf %298, %297 : vector<2x128xf32>
    %300 = math.exp %299 : vector<2x128xf32>
    %cst_68 = arith.constant 1.000000e+00 : f32
    %301 = vector.broadcast %cst_68 : f32 to vector<2x128xf32>
    %302 = arith.addf %301, %300 : vector<2x128xf32>
    %303 = tpu.reciprocal %302 {approx = true} : vector<2x128xf32> -> vector<2x128xf32>
    %304 = math.tanh %297 : vector<2x128xf32>
    %305 = vector.extract_strided_slice %303 {offsets = [0, 0], sizes = [2, 32], strides = [1, 1]} : vector<2x128xf32> to vector<2x32xf32>
    %306 = vector.extract_strided_slice %303 {offsets = [0, 32], sizes = [2, 32], strides = [1, 1]} : vector<2x128xf32> to vector<2x32xf32>
    %307 = vector.extract_strided_slice %303 {offsets = [0, 64], sizes = [2, 32], strides = [1, 1]} : vector<2x128xf32> to vector<2x32xf32>
    %308 = vector.extract_strided_slice %304 {offsets = [0, 96], sizes = [2, 32], strides = [1, 1]} : vector<2x128xf32> to vector<2x32xf32>
    %309 = arith.mulf %306, %264 : vector<2x32xf32>
    %310 = arith.mulf %305, %308 : vector<2x32xf32>
    %311 = arith.addf %309, %310 : vector<2x32xf32>
    %312 = math.tanh %311 : vector<2x32xf32>
    %313 = arith.mulf %307, %312 : vector<2x32xf32>
    %314 = arith.truncf %313 : vector<2x32xf32> to vector<2x32xbf16>
    %cst_69 = arith.constant dense<0.000000e+00> : vector<2x128xf32>
    %315 = tpu.matmul %314, %16, %cst_69 {dimension_numbers = #tpu.dot_dimension_numbers<[1], [0], [0], [1], [0, 0, 1, 1], [], []>} : vector<2x32xbf16>, vector<32x128xbf16>, vector<2x128xf32> -> vector<2x128xf32>
    %316 = vector.extract_strided_slice %295 {offsets = [0, 128], sizes = [2, 128], strides = [1, 1]} : vector<2x256xf32> to vector<2x128xf32>
    %317 = arith.addf %315, %316 : vector<2x128xf32>
    %318 = vector.broadcast %17 : vector<1x128xf32> to vector<2x128xf32>
    %319 = arith.addf %317, %318 : vector<2x128xf32>
    %cst_70 = arith.constant 0.000000e+00 : f32
    %320 = vector.broadcast %cst_70 : f32 to vector<2x128xf32>
    %321 = arith.subf %320, %319 : vector<2x128xf32>
    %322 = math.exp %321 : vector<2x128xf32>
    %cst_71 = arith.constant 1.000000e+00 : f32
    %323 = vector.broadcast %cst_71 : f32 to vector<2x128xf32>
    %324 = arith.addf %323, %322 : vector<2x128xf32>
    %325 = tpu.reciprocal %324 {approx = true} : vector<2x128xf32> -> vector<2x128xf32>
    %326 = math.tanh %319 : vector<2x128xf32>
    %327 = vector.extract_strided_slice %325 {offsets = [0, 0], sizes = [2, 32], strides = [1, 1]} : vector<2x128xf32> to vector<2x32xf32>
    %328 = vector.extract_strided_slice %325 {offsets = [0, 32], sizes = [2, 32], strides = [1, 1]} : vector<2x128xf32> to vector<2x32xf32>
    %329 = vector.extract_strided_slice %325 {offsets = [0, 64], sizes = [2, 32], strides = [1, 1]} : vector<2x128xf32> to vector<2x32xf32>
    %330 = vector.extract_strided_slice %326 {offsets = [0, 96], sizes = [2, 32], strides = [1, 1]} : vector<2x128xf32> to vector<2x32xf32>
    %331 = arith.mulf %328, %286 : vector<2x32xf32>
    %332 = arith.mulf %327, %330 : vector<2x32xf32>
    %333 = arith.addf %331, %332 : vector<2x32xf32>
    %334 = math.tanh %333 : vector<2x32xf32>
    %335 = arith.mulf %329, %334 : vector<2x32xf32>
    %336 = arith.truncf %335 : vector<2x32xf32> to vector<2x32xbf16>
    %c192 = arith.constant 192 : index
    %c0_72 = arith.constant 0 : index
    %337 = vector.load %arg11[%c192, %c0_72] : memref<256x768xbf16, #tpu.memory_space<vmem>>, vector<32x768xbf16>
    %cst_73 = arith.constant dense<0.000000e+00> : vector<2x768xf32>
    %338 = tpu.matmul %336, %337, %cst_73 {dimension_numbers = #tpu.dot_dimension_numbers<[1], [0], [0], [1], [0, 0, 1, 1], [], []>} : vector<2x32xbf16>, vector<32x768xbf16>, vector<2x768xf32> -> vector<2x768xf32>
    %339 = arith.addf %292, %338 : vector<2x768xf32>
    %340 = tpu.concatenate %313, %335 in 1 : vector<2x32xf32>, vector<2x32xf32> -> vector<2x64xf32>
    %341 = arith.truncf %340 : vector<2x64xf32> to vector<2x64xbf16>
    %cst_74 = arith.constant dense<0.000000e+00> : vector<2x256xf32>
    %342 = tpu.matmul %341, %15, %cst_74 {dimension_numbers = #tpu.dot_dimension_numbers<[1], [0], [0], [1], [0, 0, 1, 1], [], []>} : vector<2x64xbf16>, vector<64x256xbf16>, vector<2x256xf32> -> vector<2x256xf32>
    %343 = vector.extract_strided_slice %342 {offsets = [0, 0], sizes = [2, 128], strides = [1, 1]} : vector<2x256xf32> to vector<2x128xf32>
    %344 = arith.addf %14, %343 : vector<2x128xf32>
    %cst_75 = arith.constant 0.000000e+00 : f32
    %345 = vector.broadcast %cst_75 : f32 to vector<2x128xf32>
    %346 = arith.subf %345, %344 : vector<2x128xf32>
    %347 = math.exp %346 : vector<2x128xf32>
    %cst_76 = arith.constant 1.000000e+00 : f32
    %348 = vector.broadcast %cst_76 : f32 to vector<2x128xf32>
    %349 = arith.addf %348, %347 : vector<2x128xf32>
    %350 = tpu.reciprocal %349 {approx = true} : vector<2x128xf32> -> vector<2x128xf32>
    %351 = math.tanh %344 : vector<2x128xf32>
    %352 = vector.extract_strided_slice %350 {offsets = [0, 0], sizes = [2, 32], strides = [1, 1]} : vector<2x128xf32> to vector<2x32xf32>
    %353 = vector.extract_strided_slice %350 {offsets = [0, 32], sizes = [2, 32], strides = [1, 1]} : vector<2x128xf32> to vector<2x32xf32>
    %354 = vector.extract_strided_slice %350 {offsets = [0, 64], sizes = [2, 32], strides = [1, 1]} : vector<2x128xf32> to vector<2x32xf32>
    %355 = vector.extract_strided_slice %351 {offsets = [0, 96], sizes = [2, 32], strides = [1, 1]} : vector<2x128xf32> to vector<2x32xf32>
    %356 = arith.mulf %353, %311 : vector<2x32xf32>
    %357 = arith.mulf %352, %355 : vector<2x32xf32>
    %358 = arith.addf %356, %357 : vector<2x32xf32>
    %359 = math.tanh %358 : vector<2x32xf32>
    %360 = arith.mulf %354, %359 : vector<2x32xf32>
    %361 = arith.truncf %360 : vector<2x32xf32> to vector<2x32xbf16>
    %cst_77 = arith.constant dense<0.000000e+00> : vector<2x128xf32>
    %362 = tpu.matmul %361, %16, %cst_77 {dimension_numbers = #tpu.dot_dimension_numbers<[1], [0], [0], [1], [0, 0, 1, 1], [], []>} : vector<2x32xbf16>, vector<32x128xbf16>, vector<2x128xf32> -> vector<2x128xf32>
    %363 = vector.extract_strided_slice %342 {offsets = [0, 128], sizes = [2, 128], strides = [1, 1]} : vector<2x256xf32> to vector<2x128xf32>
    %364 = arith.addf %362, %363 : vector<2x128xf32>
    %365 = vector.broadcast %17 : vector<1x128xf32> to vector<2x128xf32>
    %366 = arith.addf %364, %365 : vector<2x128xf32>
    %cst_78 = arith.constant 0.000000e+00 : f32
    %367 = vector.broadcast %cst_78 : f32 to vector<2x128xf32>
    %368 = arith.subf %367, %366 : vector<2x128xf32>
    %369 = math.exp %368 : vector<2x128xf32>
    %cst_79 = arith.constant 1.000000e+00 : f32
    %370 = vector.broadcast %cst_79 : f32 to vector<2x128xf32>
    %371 = arith.addf %370, %369 : vector<2x128xf32>
    %372 = tpu.reciprocal %371 {approx = true} : vector<2x128xf32> -> vector<2x128xf32>
    %373 = math.tanh %366 : vector<2x128xf32>
    %374 = vector.extract_strided_slice %372 {offsets = [0, 0], sizes = [2, 32], strides = [1, 1]} : vector<2x128xf32> to vector<2x32xf32>
    %375 = vector.extract_strided_slice %372 {offsets = [0, 32], sizes = [2, 32], strides = [1, 1]} : vector<2x128xf32> to vector<2x32xf32>
    %376 = vector.extract_strided_slice %372 {offsets = [0, 64], sizes = [2, 32], strides = [1, 1]} : vector<2x128xf32> to vector<2x32xf32>
    %377 = vector.extract_strided_slice %373 {offsets = [0, 96], sizes = [2, 32], strides = [1, 1]} : vector<2x128xf32> to vector<2x32xf32>
    %378 = arith.mulf %375, %333 : vector<2x32xf32>
    %379 = arith.mulf %374, %377 : vector<2x32xf32>
    %380 = arith.addf %378, %379 : vector<2x32xf32>
    %381 = math.tanh %380 : vector<2x32xf32>
    %382 = arith.mulf %376, %381 : vector<2x32xf32>
    %383 = arith.truncf %382 : vector<2x32xf32> to vector<2x32xbf16>
    %c224 = arith.constant 224 : index
    %c0_80 = arith.constant 0 : index
    %384 = vector.load %arg11[%c224, %c0_80] : memref<256x768xbf16, #tpu.memory_space<vmem>>, vector<32x768xbf16>
    %cst_81 = arith.constant dense<0.000000e+00> : vector<2x768xf32>
    %385 = tpu.matmul %383, %384, %cst_81 {dimension_numbers = #tpu.dot_dimension_numbers<[1], [0], [0], [1], [0, 0, 1, 1], [], []>} : vector<2x32xbf16>, vector<32x768xbf16>, vector<2x768xf32> -> vector<2x768xf32>
    %386 = arith.addf %339, %385 : vector<2x768xf32>
    %c0_82 = arith.constant 0 : index
    %c0_83 = arith.constant 0 : index
    %387 = vector.load %arg9[%c0_82, %c0_83] : memref<1x768xf32, #tpu.memory_space<vmem>>, vector<1x768xf32>
    %388 = vector.broadcast %387 : vector<1x768xf32> to vector<2x768xf32>
    %389 = arith.addf %386, %388 : vector<2x768xf32>
    %c0_84 = arith.constant 0 : index
    %c0_85 = arith.constant 0 : index
    %390 = vector.load %arg10[%c0_84, %c0_85] : memref<2x768xf32, #tpu.memory_space<vmem>>, vector<2x768xf32>
    tpu.vector_store %arg10[%c0_84, %c0_85], %389 {strides = array<i32>} : memref<2x768xf32, #tpu.memory_space<vmem>>, vector<2x768xf32>,
    return
  }
}

</mosaic_0001>

<llo_original>
// kernel: tpu_custom_call.1
$region0: #{tpu_custom_call.1}
  #allocation0 [shape = 'u32[]', space=smem, size = 0x4, offset = 0x4, fixed_abs, tag = 'smem constant byte address 0x4 - core index']
  #allocation1 [shape = 'u32[72,128]{1,0:T(1,128)}', space=vmem, size = 0x9000, scoped, tag = 'internal scratch']
  #allocation2 [shape = 'bf16[256,768]{1,0:T(8,128)(2,1)}', space=vmem, size = 0x60000, scoped, tag = 'scratch operand']
  #allocation3 [shape = 's32[1]{0}', space=sflag, size = 0x4, scoped, tag = 'scratch operand']
  #allocation16 [shape = 's32[]', space=sflag, size = 0x4, offset = 0, fixed_abs, tag = 'sflag constant byte address 0x0 - dummy sync flag']
  #allocation17 [shape = 's32[]', space=sflag, size = 0x4, offset = 0, fixed_abs, tag = 'sflag constant byte address 0x0 - dummy sync flag']
  #allocation18 [shape = 'u32[]', space=smem, size = 0x4, offset = 0x44, fixed_abs, tag = 'smem constant byte address 0x44 - assertion arg 0']
  #allocation19 [shape = 'u32[]', space=smem, size = 0x4, offset = 0x48, fixed_abs, tag = 'smem constant byte address 0x48 - assertion arg 1']
  %s0 = inlined_call_operand.hbm [shape: f32[2,16], index: 0, kind: input, shape index: {}]
  %s1 = inlined_call_operand.hbm [shape: bf16[16,32], index: 1, kind: input, shape index: {}]
  %s2 = inlined_call_operand.vmem [shape: f32[1,32], index: 2, kind: input, shape index: {}]
  %s3 = inlined_call_operand.hbm [shape: bf16[32,128], index: 3, kind: input, shape index: {}]
  %s4 = inlined_call_operand.vmem [shape: f32[1,128], index: 4, kind: input, shape index: {}]
  %s5 = inlined_call_operand.hbm [shape: bf16[64,256], index: 5, kind: input, shape index: {}]
  %s6 = inlined_call_operand.hbm [shape: bf16[32,128], index: 6, kind: input, shape index: {}]
  %s7 = inlined_call_operand.hbm [shape: f32[1,128], index: 7, kind: input, shape index: {}]
  %s8 = inlined_call_operand.hbm [shape: bf16[256,768], index: 8, kind: input, shape index: {}]
  %s9 = inlined_call_operand.vmem [shape: f32[1,768], index: 9, kind: input, shape index: {}]
  %s10 = inlined_call_operand.hbm [shape: f32[2,768], index: 10, kind: output, shape index: {}]
  %s11 = sld [smem:[#allocation0]]
  $region74: #{tpu_custom_call.1} parent=0
    _
  %s13 = ssub.s32 1, %s11
  %s14 = scalar_select 0, %s13, %s11
  $region1: #{tpu_custom_call.1} parent=0
    #allocation4 [shape = 'u8[1024]{0}', space=vmem, size = 0x400, scoped, tag = 'input window, operand 0, single buffered']
    #allocation5 [shape = 's32[1]{0}', space=sflag, size = 0x4, scoped, tag = 'scoped memory for tpu_custom_call.1']
    #allocation6 [shape = 's32[1]{0}', space=sflag, size = 0x4, scoped, tag = 'scoped memory for tpu_custom_call.1']
    #allocation7 [shape = 'u8[4096]{0}', space=vmem, size = 0x1000, scoped, tag = 'input window, operand 1, single buffered']
    #allocation8 [shape = 's32[1]{0}', space=sflag, size = 0x4, scoped, tag = 'scoped memory for tpu_custom_call.1']
    #allocation9 [shape = 'u8[8192]{0}', space=vmem, size = 0x2000, scoped, tag = 'input window, operand 3, single buffered']
    #allocation10 [shape = 'u8[32768]{0}', space=vmem, size = 0x8000, scoped, tag = 'input window, operand 5, single buffered']
    #allocation11 [shape = 's32[1]{0}', space=sflag, size = 0x4, scoped, tag = 'scoped memory for tpu_custom_call.1']
    #allocation12 [shape = 'u8[8192]{0}', space=vmem, size = 0x2000, scoped, tag = 'input window, operand 6, single buffered']
    #allocation13 [shape = 'u8[512]{0}', space=vmem, size = 0x400, scoped, tag = 'input window, operand 7, single buffered']
    #allocation14 [shape = 's32[1]{0}', space=sflag, size = 0x4, scoped, tag = 'scoped memory for tpu_custom_call.1']
    #allocation15 [shape = 'u8[6144]{0}', space=vmem, size = 0x1800, scoped, tag = 'output window, operand 0, single buffered']
    %15 = vsyncpa [#allocation5], 0
    %16 = vsyncpa [#allocation8], 0
    %17 = vsyncpa [#allocation11], 0
    %18 = vsyncpa [#allocation14], 0
    %19 = vsyncpa [#allocation6], 0
    // Predicated region
    $region2: #{tpu_custom_call.1} parent=1 // pred_check
      _
    $region3: #{tpu_custom_call.1} parent=1 // pred_check_branch
      %21 = sbr.rel (0) target = $region5
    $region4: #{tpu_custom_call.1} parent=1 // pred_region
      %23 = vsyncadd [#allocation5], 0
      %s25 = sshll.u32 %s0, 4
      %s26 = int_to_ptr.hbm [resolvable:$true] %s25
      %s27 = sshll.u32 [#allocation4], 4
      %s28 = int_to_ptr.vmem [resolvable:$true] %s27
      %30 = dma.hbm_to_vmem [thread:$0]  %s26, 32, %s28, [#allocation5]
    $region5: #{tpu_custom_call.1} parent=1 // pred_fallthru
      _
    // Predicated region
    $region6: #{tpu_custom_call.1} parent=1 // pred_check
      _
    $region7: #{tpu_custom_call.1} parent=1 // pred_check_branch
      %32 = sbr.rel (0) target = $region9
    $region8: #{tpu_custom_call.1} parent=1 // pred_region
      %34 = vsyncadd [#allocation8], 0
      %s35 = sshll.u32 %s1, 4
      %s36 = int_to_ptr.hbm [resolvable:$true] %s35
      %s37 = sshll.u32 [#allocation7], 4
      %s38 = int_to_ptr.vmem [resolvable:$true] %s37
      %43 = dma.hbm_to_vmem [thread:$0]  %s36, 128, %s38, [#allocation8], 64, 64, 4
    $region9: #{tpu_custom_call.1} parent=1 // pred_fallthru
      _
    // Predicated region
    $region10: #{tpu_custom_call.1} parent=1 // pred_check
      _
    $region11: #{tpu_custom_call.1} parent=1 // pred_check_branch
      %45 = sbr.rel (0) target = $region13
    $region12: #{tpu_custom_call.1} parent=1 // pred_region
      _
    $region13: #{tpu_custom_call.1} parent=1 // pred_fallthru
      _
    // Predicated region
    $region14: #{tpu_custom_call.1} parent=1 // pred_check
      _
    $region15: #{tpu_custom_call.1} parent=1 // pred_check_branch
      %47 = sbr.rel (0) target = $region17
    $region16: #{tpu_custom_call.1} parent=1 // pred_region
      %49 = vsyncadd [#allocation8], 0
      %s50 = sshll.u32 %s3, 4
      %s51 = int_to_ptr.hbm [resolvable:$true] %s50
      %s52 = sshll.u32 [#allocation9], 4
      %s53 = int_to_ptr.vmem [resolvable:$true] %s52
      %58 = dma.hbm_to_vmem [thread:$0]  %s51, 256, %s53, [#allocation8], 64, 64, 4
    $region17: #{tpu_custom_call.1} parent=1 // pred_fallthru
      _
    // Predicated region
    $region18: #{tpu_custom_call.1} parent=1 // pred_check
      _
    $region19: #{tpu_custom_call.1} parent=1 // pred_check_branch
      %60 = sbr.rel (0) target = $region21
    $region20: #{tpu_custom_call.1} parent=1 // pred_region
      _
    $region21: #{tpu_custom_call.1} parent=1 // pred_fallthru
      _
    // Predicated region
    $region22: #{tpu_custom_call.1} parent=1 // pred_check
      _
    $region23: #{tpu_custom_call.1} parent=1 // pred_check_branch
      %62 = sbr.rel (0) target = $region25
    $region24: #{tpu_custom_call.1} parent=1 // pred_region
      %64 = vsyncadd [#allocation11], 0
      %s65 = sshll.u32 %s5, 4
      %s66 = int_to_ptr.hbm [resolvable:$true] %s65
      %s67 = sshll.u32 [#allocation10], 4
      %s68 = int_to_ptr.vmem [resolvable:$true] %s67
      %73 = dma.hbm_to_vmem [thread:$0]  %s66, 1024, %s68, [#allocation11], 128, 128, 8
    $region25: #{tpu_custom_call.1} parent=1 // pred_fallthru
      _
    // Predicated region
    $region26: #{tpu_custom_call.1} parent=1 // pred_check
      _
    $region27: #{tpu_custom_call.1} parent=1 // pred_check_branch
      %75 = sbr.rel (0) target = $region29
    $region28: #{tpu_custom_call.1} parent=1 // pred_region
      %77 = vsyncadd [#allocation11], 0
      %s78 = sshll.u32 %s6, 4
      %s79 = int_to_ptr.hbm [resolvable:$true] %s78
      %s80 = sshll.u32 [#allocation12], 4
      %s81 = int_to_ptr.vmem [resolvable:$true] %s80
      %86 = dma.hbm_to_vmem [thread:$0]  %s79, 256, %s81, [#allocation11], 64, 64, 4
    $region29: #{tpu_custom_call.1} parent=1 // pred_fallthru
      _
    // Predicated region
    $region30: #{tpu_custom_call.1} parent=1 // pred_check
      _
    $region31: #{tpu_custom_call.1} parent=1 // pred_check_branch
      %88 = sbr.rel (0) target = $region33
    $region32: #{tpu_custom_call.1} parent=1 // pred_region
      %90 = vsyncadd [#allocation14], 0
      %s92 = sshll.u32 %s7, 4
      %s93 = int_to_ptr.hbm [resolvable:$true] %s92
      %s94 = sshll.u32 [#allocation13], 4
      %s95 = int_to_ptr.vmem [resolvable:$true] %s94
      %97 = dma.hbm_to_vmem [thread:$0]  %s93, 16, %s95, [#allocation14]
    $region33: #{tpu_custom_call.1} parent=1 // pred_fallthru
      _
    // Predicated region
    $region34: #{tpu_custom_call.1} parent=1 // pred_check
      _
    $region35: #{tpu_custom_call.1} parent=1 // pred_check_branch
      %99 = sbr.rel (0) target = $region37
    $region36: #{tpu_custom_call.1} parent=1 // pred_region
      _
    $region37: #{tpu_custom_call.1} parent=1 // pred_fallthru
      _
    // Predicated region
    $region38: #{tpu_custom_call.1} parent=1 // pred_check
      _
    $region39: #{tpu_custom_call.1} parent=1 // pred_check_branch
      %101 = sbr.rel (0) target = $region41
    $region40: #{tpu_custom_call.1} parent=1 // pred_region
      %103 = dma.done [#allocation5], 32
    $region41: #{tpu_custom_call.1} parent=1 // pred_fallthru
      _
    // Predicated region
    $region42: #{tpu_custom_call.1} parent=1 // pred_check
      _
    $region43: #{tpu_custom_call.1} parent=1 // pred_check_branch
      %105 = sbr.rel (0) target = $region45
    $region44: #{tpu_custom_call.1} parent=1 // pred_region
      %107 = dma.done [#allocation8], 128
    $region45: #{tpu_custom_call.1} parent=1 // pred_fallthru
      _
    // Predicated region
    $region46: #{tpu_custom_call.1} parent=1 // pred_check
      _
    $region47: #{tpu_custom_call.1} parent=1 // pred_check_branch
      %109 = sbr.rel (0) target = $region49
    $region48: #{tpu_custom_call.1} parent=1 // pred_region
      %111 = dma.done [#allocation8], 256
    $region49: #{tpu_custom_call.1} parent=1 // pred_fallthru
      _
    // Predicated region
    $region50: #{tpu_custom_call.1} parent=1 // pred_check
      _
    $region51: #{tpu_custom_call.1} parent=1 // pred_check_branch
      %113 = sbr.rel (0) target = $region53
    $region52: #{tpu_custom_call.1} parent=1 // pred_region
      %115 = dma.done [#allocation11], 1024
    $region53: #{tpu_custom_call.1} parent=1 // pred_fallthru
      _
    // Predicated region
    $region54: #{tpu_custom_call.1} parent=1 // pred_check
      _
    $region55: #{tpu_custom_call.1} parent=1 // pred_check_branch
      %117 = sbr.rel (0) target = $region57
    $region56: #{tpu_custom_call.1} parent=1 // pred_region
      %119 = dma.done [#allocation11], 256
    $region57: #{tpu_custom_call.1} parent=1 // pred_fallthru
      _
    // Predicated region
    $region58: #{tpu_custom_call.1} parent=1 // pred_check
      _
    $region59: #{tpu_custom_call.1} parent=1 // pred_check_branch
      %121 = sbr.rel (0) target = $region61
    $region60: #{tpu_custom_call.1} parent=1 // pred_region
      %123 = dma.done [#allocation14], 16
    $region61: #{tpu_custom_call.1} parent=1 // pred_fallthru
      _
    // Predicated region
    $region62: #{tpu_custom_call.1} parent=1 // pred_check
      _
    $region63: #{tpu_custom_call.1} parent=1 // pred_check_branch
      %126 = sbr.rel target = $region65
    $region64: #{tpu_custom_call.1} parent=1 // pred_region
      %127 = sst [smem:[#allocation18]] [#allocation17]
      %128 = sst [smem:[#allocation19]] [#allocation16]
    $region65: #{tpu_custom_call.1} parent=1 // pred_fallthru
      _
    %130 = shalt.err (0)
    %s132 = sshll.u32 %s8, 4
    %s133 = int_to_ptr.hbm [resolvable:$true] %s132
    %s134 = sshll.u32 [#allocation2], 4
    %s135 = int_to_ptr.vmem [resolvable:$true] %s134
    %137 = dma.hbm_to_vmem [thread:$0]  %s133, 12288, %s135, [#allocation3]
    %v138 = vld [vmem:[#allocation4] sm:$0x3]
    %v139 = vpack.c.bf16 %v138, %v138
    %v140 = vld [vmem:[#allocation7] sm:$0xf]
    %v141 = vld [vmem:[#allocation7 + $0x4] sm:$0xf]
    %v142 = vld [vmem:[%s2] sm:$0x1]
    %v144 = vperm.slane %v142, 0
    %v148 = vunpack.c.l.b16 %v140
    %v149 = vunpack.c.l.b16 %v141
    %v150 = vpack.c.b16 %v149, %v148
    %vm152 = vcmask 130048
    %v154 = vsel %vm152, %v139, 0
    %156 = vmatpush.bf16.msra.mxu0 0
    %157 = vmatpush.bf16.msra.mxu0 0
    %158 = vmatpush.bf16.msra.mxu0 0
    %159 = vmatpush.bf16.msra.mxu0 0
    %160 = vmatpush.bf16.msra.mxu0 0
    %161 = vmatpush.bf16.msra.mxu0 0
    %162 = vmatpush.bf16.msra.mxu0 0
    %163 = vmatpush.bf16.msra.mxu0 %v150
    %164 = vmatmul.bf16.gmra.mxu0 %v154
    %v165 = vpop.f32.mrf.mxu0
    %v166 = vadd.f32 %v144, %v165
    %v167 = vpop.f32.mrf.mxu0
    %168 = vdwg.mxu0
    %v169 = vmax.f32 %v166, 0.0
    %v170 = vpack.c.bf16 %v169, %v169
    %v171 = vld [vmem:[#allocation9] sm:$0xf]
    %v172 = vld [vmem:[#allocation9 + $0x4] sm:$0xf]
    %v173 = vld [vmem:[#allocation9 + $0x8] sm:$0xf]
    %v174 = vld [vmem:[#allocation9 + $0xc] sm:$0xf]
    %v175 = vld [vmem:[%s4] sm:$0x1]
    %v177 = vperm.slane %v175, 0
    %v183 = vunpack.c.l.b16 %v171
    %v184 = vunpack.c.l.b16 %v172
    %v185 = vunpack.c.l.b16 %v173
    %v186 = vunpack.c.l.b16 %v174
    %v187 = vpack.c.b16 %v184, %v183
    %v188 = vpack.c.b16 %v186, %v185
    %vm191 = vcmask 261120
    %v193 = vsel %vm191, %v170, 0
    %195 = vmatpush.bf16.msra.mxu0 0
    %196 = vmatpush.bf16.msra.mxu0 0
    %197 = vmatpush.bf16.msra.mxu0 0
    %198 = vmatpush.bf16.msra.mxu0 0
    %199 = vmatpush.bf16.msra.mxu0 0
    %200 = vmatpush.bf16.msra.mxu0 0
    %201 = vmatpush.bf16.msra.mxu0 %v188
    %202 = vmatpush.bf16.msra.mxu0 %v187
    %203 = vmatmul.bf16.gmra.mxu0 %v193
    %v204 = vpop.f32.mrf.mxu0
    %v205 = vadd.f32 %v177, %v204
    %v206 = vpop.f32.mrf.mxu0
    %207 = vdwg.mxu0
    %v208 = vld [vmem:[#allocation10] sm:$0xff]
    %v209 = vld [vmem:[#allocation10 + $0x8] sm:$0xff]
    %v210 = vld [vmem:[#allocation10 + $0x10] sm:$0xff]
    %v211 = vld [vmem:[#allocation10 + $0x18] sm:$0xff]
    %v212 = vld [vmem:[#allocation10 + $0x20] sm:$0xff]
    %v213 = vld [vmem:[#allocation10 + $0x28] sm:$0xff]
    %v214 = vld [vmem:[#allocation10 + $0x30] sm:$0xff]
    %v215 = vld [vmem:[#allocation10 + $0x38] sm:$0xff]
    %v216 = vld [vmem:[#allocation12] sm:$0xf]
    %v217 = vld [vmem:[#allocation12 + $0x4] sm:$0xf]
    %v218 = vld [vmem:[#allocation12 + $0x8] sm:$0xf]
    %v219 = vld [vmem:[#allocation12 + $0xc] sm:$0xf]
    %v220 = vld [vmem:[#allocation13] sm:$0x1]
    %v221 = vsub.f32 0.0, %v205
    %v222 = vmul.f32 %v221, 1.442695
    %v223 = vpow.pop %v222
    %v224 = vadd.f32 %v223, 1.0
    %v225 = vrcp.pop %v224
    %v226 = vtanh.pop %v205
    %v227 = vmul.f32 %v225, 0.0
    %229 = vrot.lane.b32.xlu0 %v226, 32
    %v230 = vpop.permute.xlu0 %229
    %v232 = vmul.f32 %v225, %v230
    %234 = vrot.lane.b32.xlu0 %v232, 32
    %v235 = vpop.permute.xlu0 %234
    %v237 = vadd.f32 %v227, %v235
    %v238 = vtanh.pop %v237
    %240 = vrot.lane.b32.xlu0 %v238, 32
    %v241 = vpop.permute.xlu0 %240
    %v243 = vmul.f32 %v225, %v241
    %v244 = vpack.c.bf16 %v243, %v243
    %v246 = vperm.slane %v220, 0
    %249 = vrot.lane.b32.xlu0 %v244, 64
    %v250 = vpop.permute.xlu0 %249
    %v255 = vunpack.c.l.b16 %v216
    %v256 = vunpack.c.l.b16 %v217
    %v257 = vunpack.c.l.b16 %v218
    %v258 = vunpack.c.l.b16 %v219
    %v259 = vpack.c.b16 %v256, %v255
    %v260 = vpack.c.b16 %v258, %v257
    %v264 = vsel %vm191, %v250, 0
    %266 = vmatpush.bf16.msra.mxu0 0
    %267 = vmatpush.bf16.msra.mxu0 0
    %268 = vmatpush.bf16.msra.mxu0 0
    %269 = vmatpush.bf16.msra.mxu0 0
    %270 = vmatpush.bf16.msra.mxu0 0
    %271 = vmatpush.bf16.msra.mxu0 0
    %272 = vmatpush.bf16.msra.mxu0 %v260
    %273 = vmatpush.bf16.msra.mxu0 %v259
    %274 = vmatmul.bf16.gmra.mxu0 %v264
    %v275 = vpop.f32.mrf.mxu0
    %v276 = vadd.f32 %v246, %v275
    %v277 = vpop.f32.mrf.mxu0
    %278 = vdwg.mxu0
    %v279 = vsub.f32 0.0, %v276
    %v280 = vmul.f32 %v279, 1.442695
    %v281 = vpow.pop %v280
    %v282 = vadd.f32 %v281, 1.0
    %v283 = vrcp.pop %v282
    %v284 = vtanh.pop %v276
    %v285 = vmul.f32 %v283, 0.0
    %287 = vrot.lane.b32.xlu0 %v284, 32
    %v288 = vpop.permute.xlu0 %287
    %v290 = vmul.f32 %v283, %v288
    %292 = vrot.lane.b32.xlu0 %v290, 32
    %v293 = vpop.permute.xlu0 %292
    %v295 = vadd.f32 %v285, %v293
    %v296 = vtanh.pop %v295
    %298 = vrot.lane.b32.xlu0 %v296, 32
    %v299 = vpop.permute.xlu0 %298
    %v301 = vmul.f32 %v283, %v299
    %s302 = smul.u32 4, 32
    %s303 = smul.u32 %s302, 6
    %s304 = sshll.u32 %s303, 4
    %305 = dma.done [#allocation3], %s304
    %v306 = vpack.c.bf16 %v301, %v301
    %v307 = vld [vmem:[#allocation2] sm:$0xff]
    %v308 = vld [vmem:[#allocation2 + $0x8] sm:$0xff]
    %v309 = vld [vmem:[#allocation2 + $0x10] sm:$0xff]
    %v310 = vld [vmem:[#allocation2 + $0x18] sm:$0xff]
    %v311 = vld [vmem:[#allocation2 + $0x20] sm:$0xff]
    %v312 = vld [vmem:[#allocation2 + $0x28] sm:$0xff]
    %v313 = vld [vmem:[#allocation2 + $0x30] sm:$0xff]
    %v314 = vld [vmem:[#allocation2 + $0x38] sm:$0xff]
    %v315 = vld [vmem:[#allocation2 + $0x40] sm:$0xff]
    %v316 = vld [vmem:[#allocation2 + $0x48] sm:$0xff]
    %v317 = vld [vmem:[#allocation2 + $0x50] sm:$0xff]
    %v318 = vld [vmem:[#allocation2 + $0x58] sm:$0xff]
    %320 = vrot.lane.b32.xlu0 %v243, 64
    %v321 = vpop.permute.xlu0 %320
    %324 = vrot.lane.b32.xlu0 %v301, 96
    %v325 = vpop.permute.xlu0 %324
    %v327 = vsel %vm191, %v321, %v325
    %v328 = vpack.c.bf16 %v327, %v327
    %v337 = vunpack.c.l.b16 %v208
    %v338 = vunpack.c.h.b16 %v208
    %v339 = vunpack.c.l.b16 %v209
    %v340 = vunpack.c.h.b16 %v209
    %v341 = vunpack.c.l.b16 %v210
    %v342 = vunpack.c.h.b16 %v210
    %v343 = vunpack.c.l.b16 %v211
    %v344 = vunpack.c.h.b16 %v211
    %v345 = vunpack.c.l.b16 %v212
    %v346 = vunpack.c.h.b16 %v212
    %v347 = vunpack.c.l.b16 %v213
    %v348 = vunpack.c.h.b16 %v213
    %v349 = vunpack.c.l.b16 %v214
    %v350 = vunpack.c.h.b16 %v214
    %v351 = vunpack.c.l.b16 %v215
    %v352 = vunpack.c.h.b16 %v215
    %v353 = vpack.c.b16 %v339, %v337
    %v354 = vpack.c.b16 %v340, %v338
    %v355 = vpack.c.b16 %v343, %v341
    %v356 = vpack.c.b16 %v344, %v342
    %v357 = vpack.c.b16 %v347, %v345
    %v358 = vpack.c.b16 %v348, %v346
    %v359 = vpack.c.b16 %v351, %v349
    %v360 = vpack.c.b16 %v352, %v350
    %vm369 = vcmask 523264
    %v371 = vsel %vm369, %v328, 0
    %373 = vmatpush.bf16.msra.mxu0 0
    %374 = vmatpush.bf16.msra.mxu0 0
    %375 = vmatpush.bf16.msra.mxu0 0
    %376 = vmatpush.bf16.msra.mxu0 0
    %377 = vmatpush.bf16.msra.mxu0 %v359
    %378 = vmatpush.bf16.msra.mxu0 %v357
    %379 = vmatpush.bf16.msra.mxu0 %v355
    %380 = vmatpush.bf16.msra.mxu0 %v353
    %381 = vmatmul.bf16.gmra.mxu0 %v371
    %v382 = vpop.f32.mrf.mxu0
    %v383 = vadd.f32 0.0, %v382
    %v384 = vpop.f32.mrf.mxu0
    %385 = vdwg.mxu0
    %386 = vmatpush.bf16.msra.mxu0 0
    %387 = vmatpush.bf16.msra.mxu0 0
    %388 = vmatpush.bf16.msra.mxu0 0
    %389 = vmatpush.bf16.msra.mxu0 0
    %390 = vmatpush.bf16.msra.mxu0 %v360
    %391 = vmatpush.bf16.msra.mxu0 %v358
    %392 = vmatpush.bf16.msra.mxu0 %v356
    %393 = vmatpush.bf16.msra.mxu0 %v354
    %394 = vmatmul.bf16.gmra.mxu0 %v371
    %v395 = vpop.f32.mrf.mxu0
    %v396 = vadd.f32 0.0, %v395
    %v397 = vpop.f32.mrf.mxu0
    %398 = vdwg.mxu0
    %v399 = vadd.f32 %v205, %v383
    %v400 = vsub.f32 0.0, %v399
    %v401 = vmul.f32 %v400, 1.442695
    %v402 = vpow.pop %v401
    %v403 = vadd.f32 %v402, 1.0
    %v404 = vrcp.pop %v403
    %v405 = vtanh.pop %v399
    %v406 = vmul.f32 %v404, %v237
    %408 = vrot.lane.b32.xlu0 %v405, 32
    %v409 = vpop.permute.xlu0 %408
    %v411 = vmul.f32 %v404, %v409
    %413 = vrot.lane.b32.xlu0 %v411, 32
    %v414 = vpop.permute.xlu0 %413
    %v416 = vadd.f32 %v406, %v414
    %v417 = vtanh.pop %v416
    %419 = vrot.lane.b32.xlu0 %v417, 32
    %v420 = vpop.permute.xlu0 %419
    %v422 = vmul.f32 %v404, %v420
    %v423 = vpack.c.bf16 %v422, %v422
    %425 = vrot.lane.b32.xlu0 %v423, 64
    %v426 = vpop.permute.xlu0 %425
    %v428 = vsel %vm191, %v426, 0
    %430 = vmatpush.bf16.msra.mxu0 0
    %431 = vmatpush.bf16.msra.mxu0 0
    %432 = vmatpush.bf16.msra.mxu0 0
    %433 = vmatpush.bf16.msra.mxu0 0
    %434 = vmatpush.bf16.msra.mxu0 0
    %435 = vmatpush.bf16.msra.mxu0 0
    %436 = vmatpush.bf16.msra.mxu0 %v260
    %437 = vmatpush.bf16.msra.mxu0 %v259
    %438 = vmatmul.bf16.gmra.mxu0 %v428
    %v439 = vpop.f32.mrf.mxu0
    %v440 = vadd.f32 %v396, %v439
    %v441 = vpop.f32.mrf.mxu0
    %442 = vdwg.mxu0
    %v443 = vadd.f32 %v440, %v246
    %v444 = vsub.f32 0.0, %v443
    %v445 = vmul.f32 %v444, 1.442695
    %v446 = vpow.pop %v445
    %v447 = vadd.f32 %v446, 1.0
    %v448 = vrcp.pop %v447
    %v449 = vtanh.pop %v443
    %v450 = vmul.f32 %v448, %v295
    %452 = vrot.lane.b32.xlu0 %v449, 32
    %v453 = vpop.permute.xlu0 %452
    %v455 = vmul.f32 %v448, %v453
    %457 = vrot.lane.b32.xlu0 %v455, 32
    %v458 = vpop.permute.xlu0 %457
    %v460 = vadd.f32 %v450, %v458
    %v461 = vtanh.pop %v460
    %463 = vrot.lane.b32.xlu0 %v461, 32
    %v464 = vpop.permute.xlu0 %463
    %v466 = vmul.f32 %v448, %v464
    %v467 = vpack.c.bf16 %v466, %v466
    %v468 = vld [vmem:[#allocation2 + $0x60] sm:$0xff]
    %v469 = vld [vmem:[#allocation2 + $0x68] sm:$0xff]
    %v470 = vld [vmem:[#allocation2 + $0x70] sm:$0xff]
    %v471 = vld [vmem:[#allocation2 + $0x78] sm:$0xff]
    %v472 = vld [vmem:[#allocation2 + $0x80] sm:$0xff]
    %v473 = vld [vmem:[#allocation2 + $0x88] sm:$0xff]
    %v474 = vld [vmem:[#allocation2 + $0x90] sm:$0xff]
    %v475 = vld [vmem:[#allocation2 + $0x98] sm:$0xff]
    %v476 = vld [vmem:[#allocation2 + $0xa0] sm:$0xff]
    %v477 = vld [vmem:[#allocation2 + $0xa8] sm:$0xff]
    %v478 = vld [vmem:[#allocation2 + $0xb0] sm:$0xff]
    %v479 = vld [vmem:[#allocation2 + $0xb8] sm:$0xff]
    %481 = vrot.lane.b32.xlu0 %v467, 64
    %v482 = vpop.permute.xlu0 %481
    %v495 = vunpack.c.l.b16 %v468
    %v496 = vunpack.c.h.b16 %v468
    %v497 = vunpack.c.l.b16 %v469
    %v498 = vunpack.c.h.b16 %v469
    %v499 = vunpack.c.l.b16 %v470
    %v500 = vunpack.c.h.b16 %v470
    %v501 = vunpack.c.l.b16 %v471
    %v502 = vunpack.c.h.b16 %v471
    %v503 = vunpack.c.l.b16 %v472
    %v504 = vunpack.c.h.b16 %v472
    %v505 = vunpack.c.l.b16 %v473
    %v506 = vunpack.c.h.b16 %v473
    %v507 = vunpack.c.l.b16 %v474
    %v508 = vunpack.c.h.b16 %v474
    %v509 = vunpack.c.l.b16 %v475
    %v510 = vunpack.c.h.b16 %v475
    %v511 = vunpack.c.l.b16 %v476
    %v512 = vunpack.c.h.b16 %v476
    %v513 = vunpack.c.l.b16 %v477
    %v514 = vunpack.c.h.b16 %v477
    %v515 = vunpack.c.l.b16 %v478
    %v516 = vunpack.c.h.b16 %v478
    %v517 = vunpack.c.l.b16 %v479
    %v518 = vunpack.c.h.b16 %v479
    %v519 = vpack.c.b16 %v501, %v495
    %v520 = vpack.c.b16 %v502, %v496
    %v521 = vpack.c.b16 %v503, %v497
    %v522 = vpack.c.b16 %v504, %v498
    %v523 = vpack.c.b16 %v505, %v499
    %v524 = vpack.c.b16 %v506, %v500
    %v525 = vpack.c.b16 %v513, %v507
    %v526 = vpack.c.b16 %v514, %v508
    %v527 = vpack.c.b16 %v515, %v509
    %v528 = vpack.c.b16 %v516, %v510
    %v529 = vpack.c.b16 %v517, %v511
    %v530 = vpack.c.b16 %v518, %v512
    %v544 = vsel %vm191, %v482, 0
    %546 = vmatpush.bf16.msra.mxu0 0
    %547 = vmatpush.bf16.msra.mxu0 0
    %548 = vmatpush.bf16.msra.mxu0 0
    %549 = vmatpush.bf16.msra.mxu0 0
    %550 = vmatpush.bf16.msra.mxu0 0
    %551 = vmatpush.bf16.msra.mxu0 0
    %552 = vmatpush.bf16.msra.mxu0 %v525
    %553 = vmatpush.bf16.msra.mxu0 %v519
    %554 = vmatmul.bf16.gmra.mxu0 %v544
    %v555 = vpop.f32.mrf.mxu0
    %v556 = vadd.f32 0.0, %v555
    %v557 = vpop.f32.mrf.mxu0
    %558 = vdwg.mxu0
    %559 = vmatpush.bf16.msra.mxu0 0
    %560 = vmatpush.bf16.msra.mxu0 0
    %561 = vmatpush.bf16.msra.mxu0 0
    %562 = vmatpush.bf16.msra.mxu0 0
    %563 = vmatpush.bf16.msra.mxu0 0
    %564 = vmatpush.bf16.msra.mxu0 0
    %565 = vmatpush.bf16.msra.mxu0 %v526
    %566 = vmatpush.bf16.msra.mxu0 %v520
    %567 = vmatmul.bf16.gmra.mxu0 %v544
    %v568 = vpop.f32.mrf.mxu0
    %v569 = vadd.f32 0.0, %v568
    %v570 = vpop.f32.mrf.mxu0
    %571 = vdwg.mxu0
    %572 = vmatpush.bf16.msra.mxu0 0
    %573 = vmatpush.bf16.msra.mxu0 0
    %574 = vmatpush.bf16.msra.mxu0 0
    %575 = vmatpush.bf16.msra.mxu0 0
    %576 = vmatpush.bf16.msra.mxu0 0
    %577 = vmatpush.bf16.msra.mxu0 0
    %578 = vmatpush.bf16.msra.mxu0 %v527
    %579 = vmatpush.bf16.msra.mxu0 %v521
    %580 = vmatmul.bf16.gmra.mxu0 %v544
    %v581 = vpop.f32.mrf.mxu0
    %v582 = vadd.f32 0.0, %v581
    %v583 = vpop.f32.mrf.mxu0
    %584 = vdwg.mxu0
    %585 = vmatpush.bf16.msra.mxu0 0
    %586 = vmatpush.bf16.msra.mxu0 0
    %587 = vmatpush.bf16.msra.mxu0 0
    %588 = vmatpush.bf16.msra.mxu0 0
    %589 = vmatpush.bf16.msra.mxu0 0
    %590 = vmatpush.bf16.msra.mxu0 0
    %591 = vmatpush.bf16.msra.mxu0 %v528
    %592 = vmatpush.bf16.msra.mxu0 %v522
    %593 = vmatmul.bf16.gmra.mxu0 %v544
    %v594 = vpop.f32.mrf.mxu0
    %v595 = vadd.f32 0.0, %v594
    %v596 = vpop.f32.mrf.mxu0
    %597 = vdwg.mxu0
    %598 = vmatpush.bf16.msra.mxu0 0
    %599 = vmatpush.bf16.msra.mxu0 0
    %600 = vmatpush.bf16.msra.mxu0 0
    %601 = vmatpush.bf16.msra.mxu0 0
    %602 = vmatpush.bf16.msra.mxu0 0
    %603 = vmatpush.bf16.msra.mxu0 0
    %604 = vmatpush.bf16.msra.mxu0 %v529
    %605 = vmatpush.bf16.msra.mxu0 %v523
    %606 = vmatmul.bf16.gmra.mxu0 %v544
    %v607 = vpop.f32.mrf.mxu0
    %v608 = vadd.f32 0.0, %v607
    %v609 = vpop.f32.mrf.mxu0
    %610 = vdwg.mxu0
    %611 = vmatpush.bf16.msra.mxu0 0
    %612 = vmatpush.bf16.msra.mxu0 0
    %613 = vmatpush.bf16.msra.mxu0 0
    %614 = vmatpush.bf16.msra.mxu0 0
    %615 = vmatpush.bf16.msra.mxu0 0
    %616 = vmatpush.bf16.msra.mxu0 0
    %617 = vmatpush.bf16.msra.mxu0 %v530
    %618 = vmatpush.bf16.msra.mxu0 %v524
    %619 = vmatmul.bf16.gmra.mxu0 %v544
    %v620 = vpop.f32.mrf.mxu0
    %v621 = vadd.f32 0.0, %v620
    %v622 = vpop.f32.mrf.mxu0
    %623 = vdwg.mxu0
    %625 = vrot.lane.b32.xlu0 %v306, 64
    %v626 = vpop.permute.xlu0 %625
    %v639 = vunpack.c.l.b16 %v307
    %v640 = vunpack.c.h.b16 %v307
    %v641 = vunpack.c.l.b16 %v308
    %v642 = vunpack.c.h.b16 %v308
    %v643 = vunpack.c.l.b16 %v309
    %v644 = vunpack.c.h.b16 %v309
    %v645 = vunpack.c.l.b16 %v310
    %v646 = vunpack.c.h.b16 %v310
    %v647 = vunpack.c.l.b16 %v311
    %v648 = vunpack.c.h.b16 %v311
    %v649 = vunpack.c.l.b16 %v312
    %v650 = vunpack.c.h.b16 %v312
    %v651 = vunpack.c.l.b16 %v313
    %v652 = vunpack.c.h.b16 %v313
    %v653 = vunpack.c.l.b16 %v314
    %v654 = vunpack.c.h.b16 %v314
    %v655 = vunpack.c.l.b16 %v315
    %v656 = vunpack.c.h.b16 %v315
    %v657 = vunpack.c.l.b16 %v316
    %v658 = vunpack.c.h.b16 %v316
    %v659 = vunpack.c.l.b16 %v317
    %v660 = vunpack.c.h.b16 %v317
    %v661 = vunpack.c.l.b16 %v318
    %v662 = vunpack.c.h.b16 %v318
    %v663 = vpack.c.b16 %v645, %v639
    %v664 = vpack.c.b16 %v646, %v640
    %v665 = vpack.c.b16 %v647, %v641
    %v666 = vpack.c.b16 %v648, %v642
    %v667 = vpack.c.b16 %v649, %v643
    %v668 = vpack.c.b16 %v650, %v644
    %v669 = vpack.c.b16 %v657, %v651
    %v670 = vpack.c.b16 %v658, %v652
    %v671 = vpack.c.b16 %v659, %v653
    %v672 = vpack.c.b16 %v660, %v654
    %v673 = vpack.c.b16 %v661, %v655
    %v674 = vpack.c.b16 %v662, %v656
    %v688 = vsel %vm191, %v626, 0
    %690 = vmatpush.bf16.msra.mxu0 0
    %691 = vmatpush.bf16.msra.mxu0 0
    %692 = vmatpush.bf16.msra.mxu0 0
    %693 = vmatpush.bf16.msra.mxu0 0
    %694 = vmatpush.bf16.msra.mxu0 0
    %695 = vmatpush.bf16.msra.mxu0 0
    %696 = vmatpush.bf16.msra.mxu0 %v669
    %697 = vmatpush.bf16.msra.mxu0 %v663
    %698 = vmatmul.bf16.gmra.mxu0 %v688
    %v699 = vpop.f32.mrf.mxu0
    %v700 = vadd.f32 %v556, %v699
    %v701 = vpop.f32.mrf.mxu0
    %702 = vdwg.mxu0
    %703 = vmatpush.bf16.msra.mxu0 0
    %704 = vmatpush.bf16.msra.mxu0 0
    %705 = vmatpush.bf16.msra.mxu0 0
    %706 = vmatpush.bf16.msra.mxu0 0
    %707 = vmatpush.bf16.msra.mxu0 0
    %708 = vmatpush.bf16.msra.mxu0 0
    %709 = vmatpush.bf16.msra.mxu0 %v670
    %710 = vmatpush.bf16.msra.mxu0 %v664
    %711 = vmatmul.bf16.gmra.mxu0 %v688
    %v712 = vpop.f32.mrf.mxu0
    %v713 = vadd.f32 %v569, %v712
    %v714 = vpop.f32.mrf.mxu0
    %715 = vdwg.mxu0
    %716 = vmatpush.bf16.msra.mxu0 0
    %717 = vmatpush.bf16.msra.mxu0 0
    %718 = vmatpush.bf16.msra.mxu0 0
    %719 = vmatpush.bf16.msra.mxu0 0
    %720 = vmatpush.bf16.msra.mxu0 0
    %721 = vmatpush.bf16.msra.mxu0 0
    %722 = vmatpush.bf16.msra.mxu0 %v671
    %723 = vmatpush.bf16.msra.mxu0 %v665
    %724 = vmatmul.bf16.gmra.mxu0 %v688
    %v725 = vpop.f32.mrf.mxu0
    %v726 = vadd.f32 %v582, %v725
    %v727 = vpop.f32.mrf.mxu0
    %728 = vdwg.mxu0
    %729 = vmatpush.bf16.msra.mxu0 0
    %730 = vmatpush.bf16.msra.mxu0 0
    %731 = vmatpush.bf16.msra.mxu0 0
    %732 = vmatpush.bf16.msra.mxu0 0
    %733 = vmatpush.bf16.msra.mxu0 0
    %734 = vmatpush.bf16.msra.mxu0 0
    %735 = vmatpush.bf16.msra.mxu0 %v672
    %736 = vmatpush.bf16.msra.mxu0 %v666
    %737 = vmatmul.bf16.gmra.mxu0 %v688
    %v738 = vpop.f32.mrf.mxu0
    %v739 = vadd.f32 %v595, %v738
    %v740 = vpop.f32.mrf.mxu0
    %741 = vdwg.mxu0
    %742 = vmatpush.bf16.msra.mxu0 0
    %743 = vmatpush.bf16.msra.mxu0 0
    %744 = vmatpush.bf16.msra.mxu0 0
    %745 = vmatpush.bf16.msra.mxu0 0
    %746 = vmatpush.bf16.msra.mxu0 0
    %747 = vmatpush.bf16.msra.mxu0 0
    %748 = vmatpush.bf16.msra.mxu0 %v673
    %749 = vmatpush.bf16.msra.mxu0 %v667
    %750 = vmatmul.bf16.gmra.mxu0 %v688
    %v751 = vpop.f32.mrf.mxu0
    %v752 = vadd.f32 %v608, %v751
    %v753 = vpop.f32.mrf.mxu0
    %754 = vdwg.mxu0
    %755 = vmatpush.bf16.msra.mxu0 0
    %756 = vmatpush.bf16.msra.mxu0 0
    %757 = vmatpush.bf16.msra.mxu0 0
    %758 = vmatpush.bf16.msra.mxu0 0
    %759 = vmatpush.bf16.msra.mxu0 0
    %760 = vmatpush.bf16.msra.mxu0 0
    %761 = vmatpush.bf16.msra.mxu0 %v674
    %762 = vmatpush.bf16.msra.mxu0 %v668
    %763 = vmatmul.bf16.gmra.mxu0 %v688
    %v764 = vpop.f32.mrf.mxu0
    %v765 = vadd.f32 %v621, %v764
    %v766 = vpop.f32.mrf.mxu0
    %767 = vdwg.mxu0
    %769 = vrot.lane.b32.xlu0 %v422, 64
    %v770 = vpop.permute.xlu0 %769
    %773 = vrot.lane.b32.xlu0 %v466, 96
    %v774 = vpop.permute.xlu0 %773
    %v776 = vsel %vm191, %v770, %v774
    %v777 = vpack.c.bf16 %v776, %v776
    %v779 = vsel %vm369, %v777, 0
    %781 = vmatpush.bf16.msra.mxu0 0
    %782 = vmatpush.bf16.msra.mxu0 0
    %783 = vmatpush.bf16.msra.mxu0 0
    %784 = vmatpush.bf16.msra.mxu0 0
    %785 = vmatpush.bf16.msra.mxu0 %v359
    %786 = vmatpush.bf16.msra.mxu0 %v357
    %787 = vmatpush.bf16.msra.mxu0 %v355
    %788 = vmatpush.bf16.msra.mxu0 %v353
    %789 = vmatmul.bf16.gmra.mxu0 %v779
    %v790 = vpop.f32.mrf.mxu0
    %v791 = vadd.f32 0.0, %v790
    %v792 = vpop.f32.mrf.mxu0
    %793 = vdwg.mxu0
    %794 = vmatpush.bf16.msra.mxu0 0
    %795 = vmatpush.bf16.msra.mxu0 0
    %796 = vmatpush.bf16.msra.mxu0 0
    %797 = vmatpush.bf16.msra.mxu0 0
    %798 = vmatpush.bf16.msra.mxu0 %v360
    %799 = vmatpush.bf16.msra.mxu0 %v358
    %800 = vmatpush.bf16.msra.mxu0 %v356
    %801 = vmatpush.bf16.msra.mxu0 %v354
    %802 = vmatmul.bf16.gmra.mxu0 %v779
    %v803 = vpop.f32.mrf.mxu0
    %v804 = vadd.f32 0.0, %v803
    %v805 = vpop.f32.mrf.mxu0
    %806 = vdwg.mxu0
    %v807 = vadd.f32 %v205, %v791
    %v808 = vsub.f32 0.0, %v807
    %v809 = vmul.f32 %v808, 1.442695
    %v810 = vpow.pop %v809
    %v811 = vadd.f32 %v810, 1.0
    %v812 = vrcp.pop %v811
    %v813 = vtanh.pop %v807
    %v814 = vmul.f32 %v812, %v416
    %816 = vrot.lane.b32.xlu0 %v813, 32
    %v817 = vpop.permute.xlu0 %816
    %v819 = vmul.f32 %v812, %v817
    %821 = vrot.lane.b32.xlu0 %v819, 32
    %v822 = vpop.permute.xlu0 %821
    %v824 = vadd.f32 %v814, %v822
    %v825 = vtanh.pop %v824
    %827 = vrot.lane.b32.xlu0 %v825, 32
    %v828 = vpop.permute.xlu0 %827
    %v830 = vmul.f32 %v812, %v828
    %v831 = vpack.c.bf16 %v830, %v830
    %833 = vrot.lane.b32.xlu0 %v831, 64
    %v834 = vpop.permute.xlu0 %833
    %v836 = vsel %vm191, %v834, 0
    %838 = vmatpush.bf16.msra.mxu0 0
    %839 = vmatpush.bf16.msra.mxu0 0
    %840 = vmatpush.bf16.msra.mxu0 0
    %841 = vmatpush.bf16.msra.mxu0 0
    %842 = vmatpush.bf16.msra.mxu0 0
    %843 = vmatpush.bf16.msra.mxu0 0
    %844 = vmatpush.bf16.msra.mxu0 %v260
    %845 = vmatpush.bf16.msra.mxu0 %v259
    %846 = vmatmul.bf16.gmra.mxu0 %v836
    %v847 = vpop.f32.mrf.mxu0
    %v848 = vadd.f32 %v804, %v847
    %v849 = vpop.f32.mrf.mxu0
    %850 = vdwg.mxu0
    %v851 = vadd.f32 %v848, %v246
    %v852 = vsub.f32 0.0, %v851
    %v853 = vmul.f32 %v852, 1.442695
    %v854 = vpow.pop %v853
    %v855 = vadd.f32 %v854, 1.0
    %v856 = vrcp.pop %v855
    %v857 = vtanh.pop %v851
    %v858 = vmul.f32 %v856, %v460
    %860 = vrot.lane.b32.xlu0 %v857, 32
    %v861 = vpop.permute.xlu0 %860
    %v863 = vmul.f32 %v856, %v861
    %865 = vrot.lane.b32.xlu0 %v863, 32
    %v866 = vpop.permute.xlu0 %865
    %v868 = vadd.f32 %v858, %v866
    %v869 = vtanh.pop %v868
    %871 = vrot.lane.b32.xlu0 %v869, 32
    %v872 = vpop.permute.xlu0 %871
    %v874 = vmul.f32 %v856, %v872
    %v875 = vpack.c.bf16 %v874, %v874
    %v876 = vld [vmem:[#allocation2 + $0xc0] sm:$0xff]
    %v877 = vld [vmem:[#allocation2 + $0xc8] sm:$0xff]
    %v878 = vld [vmem:[#allocation2 + $0xd0] sm:$0xff]
    %v879 = vld [vmem:[#allocation2 + $0xd8] sm:$0xff]
    %v880 = vld [vmem:[#allocation2 + $0xe0] sm:$0xff]
    %v881 = vld [vmem:[#allocation2 + $0xe8] sm:$0xff]
    %v882 = vld [vmem:[#allocation2 + $0xf0] sm:$0xff]
    %v883 = vld [vmem:[#allocation2 + $0xf8] sm:$0xff]
    %v884 = vld [vmem:[#allocation2 + $0x100] sm:$0xff]
    %v885 = vld [vmem:[#allocation2 + $0x108] sm:$0xff]
    %v886 = vld [vmem:[#allocation2 + $0x110] sm:$0xff]
    %v887 = vld [vmem:[#allocation2 + $0x118] sm:$0xff]
    %889 = vrot.lane.b32.xlu0 %v875, 64
    %v890 = vpop.permute.xlu0 %889
    %v903 = vunpack.c.l.b16 %v876
    %v904 = vunpack.c.h.b16 %v876
    %v905 = vunpack.c.l.b16 %v877
    %v906 = vunpack.c.h.b16 %v877
    %v907 = vunpack.c.l.b16 %v878
    %v908 = vunpack.c.h.b16 %v878
    %v909 = vunpack.c.l.b16 %v879
    %v910 = vunpack.c.h.b16 %v879
    %v911 = vunpack.c.l.b16 %v880
    %v912 = vunpack.c.h.b16 %v880
    %v913 = vunpack.c.l.b16 %v881
    %v914 = vunpack.c.h.b16 %v881
    %v915 = vunpack.c.l.b16 %v882
    %v916 = vunpack.c.h.b16 %v882
    %v917 = vunpack.c.l.b16 %v883
    %v918 = vunpack.c.h.b16 %v883
    %v919 = vunpack.c.l.b16 %v884
    %v920 = vunpack.c.h.b16 %v884
    %v921 = vunpack.c.l.b16 %v885
    %v922 = vunpack.c.h.b16 %v885
    %v923 = vunpack.c.l.b16 %v886
    %v924 = vunpack.c.h.b16 %v886
    %v925 = vunpack.c.l.b16 %v887
    %v926 = vunpack.c.h.b16 %v887
    %v927 = vpack.c.b16 %v909, %v903
    %v928 = vpack.c.b16 %v910, %v904
    %v929 = vpack.c.b16 %v911, %v905
    %v930 = vpack.c.b16 %v912, %v906
    %v931 = vpack.c.b16 %v913, %v907
    %v932 = vpack.c.b16 %v914, %v908
    %v933 = vpack.c.b16 %v921, %v915
    %v934 = vpack.c.b16 %v922, %v916
    %v935 = vpack.c.b16 %v923, %v917
    %v936 = vpack.c.b16 %v924, %v918
    %v937 = vpack.c.b16 %v925, %v919
    %v938 = vpack.c.b16 %v926, %v920
    %v952 = vsel %vm191, %v890, 0
    %954 = vmatpush.bf16.msra.mxu0 0
    %955 = vmatpush.bf16.msra.mxu0 0
    %956 = vmatpush.bf16.msra.mxu0 0
    %957 = vmatpush.bf16.msra.mxu0 0
    %958 = vmatpush.bf16.msra.mxu0 0
    %959 = vmatpush.bf16.msra.mxu0 0
    %960 = vmatpush.bf16.msra.mxu0 %v933
    %961 = vmatpush.bf16.msra.mxu0 %v927
    %962 = vmatmul.bf16.gmra.mxu0 %v952
    %v963 = vpop.f32.mrf.mxu0
    %v964 = vadd.f32 0.0, %v963
    %v965 = vpop.f32.mrf.mxu0
    %966 = vdwg.mxu0
    %967 = vmatpush.bf16.msra.mxu0 0
    %968 = vmatpush.bf16.msra.mxu0 0
    %969 = vmatpush.bf16.msra.mxu0 0
    %970 = vmatpush.bf16.msra.mxu0 0
    %971 = vmatpush.bf16.msra.mxu0 0
    %972 = vmatpush.bf16.msra.mxu0 0
    %973 = vmatpush.bf16.msra.mxu0 %v934
    %974 = vmatpush.bf16.msra.mxu0 %v928
    %975 = vmatmul.bf16.gmra.mxu0 %v952
    %v976 = vpop.f32.mrf.mxu0
    %v977 = vadd.f32 0.0, %v976
    %v978 = vpop.f32.mrf.mxu0
    %979 = vdwg.mxu0
    %980 = vmatpush.bf16.msra.mxu0 0
    %981 = vmatpush.bf16.msra.mxu0 0
    %982 = vmatpush.bf16.msra.mxu0 0
    %983 = vmatpush.bf16.msra.mxu0 0
    %984 = vmatpush.bf16.msra.mxu0 0
    %985 = vmatpush.bf16.msra.mxu0 0
    %986 = vmatpush.bf16.msra.mxu0 %v935
    %987 = vmatpush.bf16.msra.mxu0 %v929
    %988 = vmatmul.bf16.gmra.mxu0 %v952
    %v989 = vpop.f32.mrf.mxu0
    %v990 = vadd.f32 0.0, %v989
    %v991 = vpop.f32.mrf.mxu0
    %992 = vdwg.mxu0
    %993 = vmatpush.bf16.msra.mxu0 0
    %994 = vmatpush.bf16.msra.mxu0 0
    %995 = vmatpush.bf16.msra.mxu0 0
    %996 = vmatpush.bf16.msra.mxu0 0
    %997 = vmatpush.bf16.msra.mxu0 0
    %998 = vmatpush.bf16.msra.mxu0 0
    %999 = vmatpush.bf16.msra.mxu0 %v936
    %1000 = vmatpush.bf16.msra.mxu0 %v930
    %1001 = vmatmul.bf16.gmra.mxu0 %v952
    %v1002 = vpop.f32.mrf.mxu0
    %v1003 = vadd.f32 0.0, %v1002
    %v1004 = vpop.f32.mrf.mxu0
    %1005 = vdwg.mxu0
    %1006 = vmatpush.bf16.msra.mxu0 0
    %1007 = vmatpush.bf16.msra.mxu0 0
    %1008 = vmatpush.bf16.msra.mxu0 0
    %1009 = vmatpush.bf16.msra.mxu0 0
    %1010 = vmatpush.bf16.msra.mxu0 0
    %1011 = vmatpush.bf16.msra.mxu0 0
    %1012 = vmatpush.bf16.msra.mxu0 %v937
    %1013 = vmatpush.bf16.msra.mxu0 %v931
    %1014 = vmatmul.bf16.gmra.mxu0 %v952
    %v1015 = vpop.f32.mrf.mxu0
    %v1016 = vadd.f32 0.0, %v1015
    %v1017 = vpop.f32.mrf.mxu0
    %1018 = vdwg.mxu0
    %1019 = vmatpush.bf16.msra.mxu0 0
    %1020 = vmatpush.bf16.msra.mxu0 0
    %1021 = vmatpush.bf16.msra.mxu0 0
    %1022 = vmatpush.bf16.msra.mxu0 0
    %1023 = vmatpush.bf16.msra.mxu0 0
    %1024 = vmatpush.bf16.msra.mxu0 0
    %1025 = vmatpush.bf16.msra.mxu0 %v938
    %1026 = vmatpush.bf16.msra.mxu0 %v932
    %1027 = vmatmul.bf16.gmra.mxu0 %v952
    %v1028 = vpop.f32.mrf.mxu0
    %v1029 = vadd.f32 0.0, %v1028
    %v1030 = vpop.f32.mrf.mxu0
    %1031 = vdwg.mxu0
    %v1032 = vadd.f32 %v700, %v964
    %v1033 = vadd.f32 %v713, %v977
    %v1034 = vadd.f32 %v726, %v990
    %v1035 = vadd.f32 %v739, %v1003
    %v1036 = vadd.f32 %v752, %v1016
    %v1037 = vadd.f32 %v765, %v1029
    %1039 = vrot.lane.b32.xlu0 %v830, 64
    %v1040 = vpop.permute.xlu0 %1039
    %1043 = vrot.lane.b32.xlu0 %v874, 96
    %v1044 = vpop.permute.xlu0 %1043
    %v1046 = vsel %vm191, %v1040, %v1044
    %v1047 = vpack.c.bf16 %v1046, %v1046
    %v1049 = vsel %vm369, %v1047, 0
    %1051 = vmatpush.bf16.msra.mxu0 0
    %1052 = vmatpush.bf16.msra.mxu0 0
    %1053 = vmatpush.bf16.msra.mxu0 0
    %1054 = vmatpush.bf16.msra.mxu0 0
    %1055 = vmatpush.bf16.msra.mxu0 %v359
    %1056 = vmatpush.bf16.msra.mxu0 %v357
    %1057 = vmatpush.bf16.msra.mxu0 %v355
    %1058 = vmatpush.bf16.msra.mxu0 %v353
    %1059 = vmatmul.bf16.gmra.mxu0 %v1049
    %v1060 = vpop.f32.mrf.mxu0
    %v1061 = vadd.f32 0.0, %v1060
    %v1062 = vpop.f32.mrf.mxu0
    %1063 = vdwg.mxu0
    %1064 = vmatpush.bf16.msra.mxu0 0
    %1065 = vmatpush.bf16.msra.mxu0 0
    %1066 = vmatpush.bf16.msra.mxu0 0
    %1067 = vmatpush.bf16.msra.mxu0 0
    %1068 = vmatpush.bf16.msra.mxu0 %v360
    %1069 = vmatpush.bf16.msra.mxu0 %v358
    %1070 = vmatpush.bf16.msra.mxu0 %v356
    %1071 = vmatpush.bf16.msra.mxu0 %v354
    %1072 = vmatmul.bf16.gmra.mxu0 %v1049
    %v1073 = vpop.f32.mrf.mxu0
    %v1074 = vadd.f32 0.0, %v1073
    %v1075 = vpop.f32.mrf.mxu0
    %1076 = vdwg.mxu0
    %v1077 = vadd.f32 %v205, %v1061
    %v1078 = vsub.f32 0.0, %v1077
    %v1079 = vmul.f32 %v1078, 1.442695
    %v1080 = vpow.pop %v1079
    %v1081 = vadd.f32 %v1080, 1.0
    %v1082 = vrcp.pop %v1081
    %v1083 = vtanh.pop %v1077
    %v1084 = vmul.f32 %v1082, %v824
    %1086 = vrot.lane.b32.xlu0 %v1083, 32
    %v1087 = vpop.permute.xlu0 %1086
    %v1089 = vmul.f32 %v1082, %v1087
    %1091 = vrot.lane.b32.xlu0 %v1089, 32
    %v1092 = vpop.permute.xlu0 %1091
    %v1094 = vadd.f32 %v1084, %v1092
    %v1095 = vtanh.pop %v1094
    %1097 = vrot.lane.b32.xlu0 %v1095, 32
    %v1098 = vpop.permute.xlu0 %1097
    %v1100 = vmul.f32 %v1082, %v1098
    %v1101 = vpack.c.bf16 %v1100, %v1100
    %1103 = vrot.lane.b32.xlu0 %v1101, 64
    %v1104 = vpop.permute.xlu0 %1103
    %v1106 = vsel %vm191, %v1104, 0
    %1108 = vmatpush.bf16.msra.mxu0 0
    %1109 = vmatpush.bf16.msra.mxu0 0
    %1110 = vmatpush.bf16.msra.mxu0 0
    %1111 = vmatpush.bf16.msra.mxu0 0
    %1112 = vmatpush.bf16.msra.mxu0 0
    %1113 = vmatpush.bf16.msra.mxu0 0
    %1114 = vmatpush.bf16.msra.mxu0 %v260
    %1115 = vmatpush.bf16.msra.mxu0 %v259
    %1116 = vmatmul.bf16.gmra.mxu0 %v1106
    %v1117 = vpop.f32.mrf.mxu0
    %v1118 = vadd.f32 %v1074, %v1117
    %v1119 = vpop.f32.mrf.mxu0
    %1120 = vdwg.mxu0
    %v1121 = vadd.f32 %v1118, %v246
    %v1122 = vsub.f32 0.0, %v1121
    %v1123 = vmul.f32 %v1122, 1.442695
    %v1124 = vpow.pop %v1123
    %v1125 = vadd.f32 %v1124, 1.0
    %v1126 = vrcp.pop %v1125
    %v1127 = vtanh.pop %v1121
    %v1128 = vmul.f32 %v1126, %v868
    %1130 = vrot.lane.b32.xlu0 %v1127, 32
    %v1131 = vpop.permute.xlu0 %1130
    %v1133 = vmul.f32 %v1126, %v1131
    %1135 = vrot.lane.b32.xlu0 %v1133, 32
    %v1136 = vpop.permute.xlu0 %1135
    %v1138 = vadd.f32 %v1128, %v1136
    %v1139 = vtanh.pop %v1138
    %1141 = vrot.lane.b32.xlu0 %v1139, 32
    %v1142 = vpop.permute.xlu0 %1141
    %v1144 = vmul.f32 %v1126, %v1142
    %v1145 = vpack.c.bf16 %v1144, %v1144
    %v1146 = vld [vmem:[#allocation2 + $0x120] sm:$0xff]
    %v1147 = vld [vmem:[#allocation2 + $0x128] sm:$0xff]
    %v1148 = vld [vmem:[#allocation2 + $0x130] sm:$0xff]
    %v1149 = vld [vmem:[#allocation2 + $0x138] sm:$0xff]
    %v1150 = vld [vmem:[#allocation2 + $0x140] sm:$0xff]
    %v1151 = vld [vmem:[#allocation2 + $0x148] sm:$0xff]
    %v1152 = vld [vmem:[#allocation2 + $0x150] sm:$0xff]
    %v1153 = vld [vmem:[#allocation2 + $0x158] sm:$0xff]
    %v1154 = vld [vmem:[#allocation2 + $0x160] sm:$0xff]
    %v1155 = vld [vmem:[#allocation2 + $0x168] sm:$0xff]
    %v1156 = vld [vmem:[#allocation2 + $0x170] sm:$0xff]
    %v1157 = vld [vmem:[#allocation2 + $0x178] sm:$0xff]
    %1159 = vrot.lane.b32.xlu0 %v1145, 64
    %v1160 = vpop.permute.xlu0 %1159
    %v1173 = vunpack.c.l.b16 %v1146
    %v1174 = vunpack.c.h.b16 %v1146
    %v1175 = vunpack.c.l.b16 %v1147
    %v1176 = vunpack.c.h.b16 %v1147
    %v1177 = vunpack.c.l.b16 %v1148
    %v1178 = vunpack.c.h.b16 %v1148
    %v1179 = vunpack.c.l.b16 %v1149
    %v1180 = vunpack.c.h.b16 %v1149
    %v1181 = vunpack.c.l.b16 %v1150
    %v1182 = vunpack.c.h.b16 %v1150
    %v1183 = vunpack.c.l.b16 %v1151
    %v1184 = vunpack.c.h.b16 %v1151
    %v1185 = vunpack.c.l.b16 %v1152
    %v1186 = vunpack.c.h.b16 %v1152
    %v1187 = vunpack.c.l.b16 %v1153
    %v1188 = vunpack.c.h.b16 %v1153
    %v1189 = vunpack.c.l.b16 %v1154
    %v1190 = vunpack.c.h.b16 %v1154
    %v1191 = vunpack.c.l.b16 %v1155
    %v1192 = vunpack.c.h.b16 %v1155
    %v1193 = vunpack.c.l.b16 %v1156
    %v1194 = vunpack.c.h.b16 %v1156
    %v1195 = vunpack.c.l.b16 %v1157
    %v1196 = vunpack.c.h.b16 %v1157
    %v1197 = vpack.c.b16 %v1179, %v1173
    %v1198 = vpack.c.b16 %v1180, %v1174
    %v1199 = vpack.c.b16 %v1181, %v1175
    %v1200 = vpack.c.b16 %v1182, %v1176
    %v1201 = vpack.c.b16 %v1183, %v1177
    %v1202 = vpack.c.b16 %v1184, %v1178
    %v1203 = vpack.c.b16 %v1191, %v1185
    %v1204 = vpack.c.b16 %v1192, %v1186
    %v1205 = vpack.c.b16 %v1193, %v1187
    %v1206 = vpack.c.b16 %v1194, %v1188
    %v1207 = vpack.c.b16 %v1195, %v1189
    %v1208 = vpack.c.b16 %v1196, %v1190
    %v1222 = vsel %vm191, %v1160, 0
    %1224 = vmatpush.bf16.msra.mxu0 0
    %1225 = vmatpush.bf16.msra.mxu0 0
    %1226 = vmatpush.bf16.msra.mxu0 0
    %1227 = vmatpush.bf16.msra.mxu0 0
    %1228 = vmatpush.bf16.msra.mxu0 0
    %1229 = vmatpush.bf16.msra.mxu0 0
    %1230 = vmatpush.bf16.msra.mxu0 %v1203
    %1231 = vmatpush.bf16.msra.mxu0 %v1197
    %1232 = vmatmul.bf16.gmra.mxu0 %v1222
    %v1233 = vpop.f32.mrf.mxu0
    %v1234 = vadd.f32 0.0, %v1233
    %v1235 = vpop.f32.mrf.mxu0
    %1236 = vdwg.mxu0
    %1237 = vmatpush.bf16.msra.mxu0 0
    %1238 = vmatpush.bf16.msra.mxu0 0
    %1239 = vmatpush.bf16.msra.mxu0 0
    %1240 = vmatpush.bf16.msra.mxu0 0
    %1241 = vmatpush.bf16.msra.mxu0 0
    %1242 = vmatpush.bf16.msra.mxu0 0
    %1243 = vmatpush.bf16.msra.mxu0 %v1204
    %1244 = vmatpush.bf16.msra.mxu0 %v1198
    %1245 = vmatmul.bf16.gmra.mxu0 %v1222
    %v1246 = vpop.f32.mrf.mxu0
    %v1247 = vadd.f32 0.0, %v1246
    %v1248 = vpop.f32.mrf.mxu0
    %1249 = vdwg.mxu0
    %1250 = vmatpush.bf16.msra.mxu0 0
    %1251 = vmatpush.bf16.msra.mxu0 0
    %1252 = vmatpush.bf16.msra.mxu0 0
    %1253 = vmatpush.bf16.msra.mxu0 0
    %1254 = vmatpush.bf16.msra.mxu0 0
    %1255 = vmatpush.bf16.msra.mxu0 0
    %1256 = vmatpush.bf16.msra.mxu0 %v1205
    %1257 = vmatpush.bf16.msra.mxu0 %v1199
    %1258 = vmatmul.bf16.gmra.mxu0 %v1222
    %v1259 = vpop.f32.mrf.mxu0
    %v1260 = vadd.f32 0.0, %v1259
    %v1261 = vpop.f32.mrf.mxu0
    %1262 = vdwg.mxu0
    %1263 = vmatpush.bf16.msra.mxu0 0
    %1264 = vmatpush.bf16.msra.mxu0 0
    %1265 = vmatpush.bf16.msra.mxu0 0
    %1266 = vmatpush.bf16.msra.mxu0 0
    %1267 = vmatpush.bf16.msra.mxu0 0
    %1268 = vmatpush.bf16.msra.mxu0 0
    %1269 = vmatpush.bf16.msra.mxu0 %v1206
    %1270 = vmatpush.bf16.msra.mxu0 %v1200
    %1271 = vmatmul.bf16.gmra.mxu0 %v1222
    %v1272 = vpop.f32.mrf.mxu0
    %v1273 = vadd.f32 0.0, %v1272
    %v1274 = vpop.f32.mrf.mxu0
    %1275 = vdwg.mxu0
    %1276 = vmatpush.bf16.msra.mxu0 0
    %1277 = vmatpush.bf16.msra.mxu0 0
    %1278 = vmatpush.bf16.msra.mxu0 0
    %1279 = vmatpush.bf16.msra.mxu0 0
    %1280 = vmatpush.bf16.msra.mxu0 0
    %1281 = vmatpush.bf16.msra.mxu0 0
    %1282 = vmatpush.bf16.msra.mxu0 %v1207
    %1283 = vmatpush.bf16.msra.mxu0 %v1201
    %1284 = vmatmul.bf16.gmra.mxu0 %v1222
    %v1285 = vpop.f32.mrf.mxu0
    %v1286 = vadd.f32 0.0, %v1285
    %v1287 = vpop.f32.mrf.mxu0
    %1288 = vdwg.mxu0
    %1289 = vmatpush.bf16.msra.mxu0 0
    %1290 = vmatpush.bf16.msra.mxu0 0
    %1291 = vmatpush.bf16.msra.mxu0 0
    %1292 = vmatpush.bf16.msra.mxu0 0
    %1293 = vmatpush.bf16.msra.mxu0 0
    %1294 = vmatpush.bf16.msra.mxu0 0
    %1295 = vmatpush.bf16.msra.mxu0 %v1208
    %1296 = vmatpush.bf16.msra.mxu0 %v1202
    %1297 = vmatmul.bf16.gmra.mxu0 %v1222
    %v1298 = vpop.f32.mrf.mxu0
    %v1299 = vadd.f32 0.0, %v1298
    %v1300 = vpop.f32.mrf.mxu0
    %1301 = vdwg.mxu0
    %v1302 = vadd.f32 %v1032, %v1234
    %v1303 = vadd.f32 %v1033, %v1247
    %v1304 = vadd.f32 %v1034, %v1260
    %v1305 = vadd.f32 %v1035, %v1273
    %v1306 = vadd.f32 %v1036, %v1286
    %v1307 = vadd.f32 %v1037, %v1299
    %1309 = vrot.lane.b32.xlu0 %v1100, 64
    %v1310 = vpop.permute.xlu0 %1309
    %1313 = vrot.lane.b32.xlu0 %v1144, 96
    %v1314 = vpop.permute.xlu0 %1313
    %v1316 = vsel %vm191, %v1310, %v1314
    %v1317 = vpack.c.bf16 %v1316, %v1316
    %v1319 = vsel %vm369, %v1317, 0
    %1321 = vmatpush.bf16.msra.mxu0 0
    %1322 = vmatpush.bf16.msra.mxu0 0
    %1323 = vmatpush.bf16.msra.mxu0 0
    %1324 = vmatpush.bf16.msra.mxu0 0
    %1325 = vmatpush.bf16.msra.mxu0 %v359
    %1326 = vmatpush.bf16.msra.mxu0 %v357
    %1327 = vmatpush.bf16.msra.mxu0 %v355
    %1328 = vmatpush.bf16.msra.mxu0 %v353
    %1329 = vmatmul.bf16.gmra.mxu0 %v1319
    %v1330 = vpop.f32.mrf.mxu0
    %v1331 = vadd.f32 0.0, %v1330
    %v1332 = vpop.f32.mrf.mxu0
    %1333 = vdwg.mxu0
    %1334 = vmatpush.bf16.msra.mxu0 0
    %1335 = vmatpush.bf16.msra.mxu0 0
    %1336 = vmatpush.bf16.msra.mxu0 0
    %1337 = vmatpush.bf16.msra.mxu0 0
    %1338 = vmatpush.bf16.msra.mxu0 %v360
    %1339 = vmatpush.bf16.msra.mxu0 %v358
    %1340 = vmatpush.bf16.msra.mxu0 %v356
    %1341 = vmatpush.bf16.msra.mxu0 %v354
    %1342 = vmatmul.bf16.gmra.mxu0 %v1319
    %v1343 = vpop.f32.mrf.mxu0
    %v1344 = vadd.f32 0.0, %v1343
    %v1345 = vpop.f32.mrf.mxu0
    %1346 = vdwg.mxu0
    %v1347 = vadd.f32 %v205, %v1331
    %v1348 = vsub.f32 0.0, %v1347
    %v1349 = vmul.f32 %v1348, 1.442695
    %v1350 = vpow.pop %v1349
    %v1351 = vadd.f32 %v1350, 1.0
    %v1352 = vrcp.pop %v1351
    %v1353 = vtanh.pop %v1347
    %v1354 = vmul.f32 %v1352, %v1094
    %1356 = vrot.lane.b32.xlu0 %v1353, 32
    %v1357 = vpop.permute.xlu0 %1356
    %v1359 = vmul.f32 %v1352, %v1357
    %1361 = vrot.lane.b32.xlu0 %v1359, 32
    %v1362 = vpop.permute.xlu0 %1361
    %v1364 = vadd.f32 %v1354, %v1362
    %v1365 = vtanh.pop %v1364
    %1367 = vrot.lane.b32.xlu0 %v1365, 32
    %v1368 = vpop.permute.xlu0 %1367
    %v1370 = vmul.f32 %v1352, %v1368
    %v1371 = vpack.c.bf16 %v1370, %v1370
    %1373 = vrot.lane.b32.xlu0 %v1371, 64
    %v1374 = vpop.permute.xlu0 %1373
    %v1376 = vsel %vm191, %v1374, 0
    %1378 = vmatpush.bf16.msra.mxu0 0
    %1379 = vmatpush.bf16.msra.mxu0 0
    %1380 = vmatpush.bf16.msra.mxu0 0
    %1381 = vmatpush.bf16.msra.mxu0 0
    %1382 = vmatpush.bf16.msra.mxu0 0
    %1383 = vmatpush.bf16.msra.mxu0 0
    %1384 = vmatpush.bf16.msra.mxu0 %v260
    %1385 = vmatpush.bf16.msra.mxu0 %v259
    %1386 = vmatmul.bf16.gmra.mxu0 %v1376
    %v1387 = vpop.f32.mrf.mxu0
    %v1388 = vadd.f32 %v1344, %v1387
    %v1389 = vpop.f32.mrf.mxu0
    %1390 = vdwg.mxu0
    %v1391 = vadd.f32 %v1388, %v246
    %v1392 = vsub.f32 0.0, %v1391
    %v1393 = vmul.f32 %v1392, 1.442695
    %v1394 = vpow.pop %v1393
    %v1395 = vadd.f32 %v1394, 1.0
    %v1396 = vrcp.pop %v1395
    %v1397 = vtanh.pop %v1391
    %v1398 = vmul.f32 %v1396, %v1138
    %1400 = vrot.lane.b32.xlu0 %v1397, 32
    %v1401 = vpop.permute.xlu0 %1400
    %v1403 = vmul.f32 %v1396, %v1401
    %1405 = vrot.lane.b32.xlu0 %v1403, 32
    %v1406 = vpop.permute.xlu0 %1405
    %v1408 = vadd.f32 %v1398, %v1406
    %v1409 = vtanh.pop %v1408
    %1411 = vrot.lane.b32.xlu0 %v1409, 32
    %v1412 = vpop.permute.xlu0 %1411
    %v1414 = vmul.f32 %v1396, %v1412
    %v1415 = vpack.c.bf16 %v1414, %v1414
    %v1416 = vld [vmem:[#allocation2 + $0x180] sm:$0xff]
    %v1417 = vld [vmem:[#allocation2 + $0x188] sm:$0xff]
    %v1418 = vld [vmem:[#allocation2 + $0x190] sm:$0xff]
    %v1419 = vld [vmem:[#allocation2 + $0x198] sm:$0xff]
    %v1420 = vld [vmem:[#allocation2 + $0x1a0] sm:$0xff]
    %v1421 = vld [vmem:[#allocation2 + $0x1a8] sm:$0xff]
    %v1422 = vld [vmem:[#allocation2 + $0x1b0] sm:$0xff]
    %v1423 = vld [vmem:[#allocation2 + $0x1b8] sm:$0xff]
    %v1424 = vld [vmem:[#allocation2 + $0x1c0] sm:$0xff]
    %v1425 = vld [vmem:[#allocation2 + $0x1c8] sm:$0xff]
    %v1426 = vld [vmem:[#allocation2 + $0x1d0] sm:$0xff]
    %v1427 = vld [vmem:[#allocation2 + $0x1d8] sm:$0xff]
    %1429 = vrot.lane.b32.xlu0 %v1415, 64
    %v1430 = vpop.permute.xlu0 %1429
    %v1443 = vunpack.c.l.b16 %v1416
    %v1444 = vunpack.c.h.b16 %v1416
    %v1445 = vunpack.c.l.b16 %v1417
    %v1446 = vunpack.c.h.b16 %v1417
    %v1447 = vunpack.c.l.b16 %v1418
    %v1448 = vunpack.c.h.b16 %v1418
    %v1449 = vunpack.c.l.b16 %v1419
    %v1450 = vunpack.c.h.b16 %v1419
    %v1451 = vunpack.c.l.b16 %v1420
    %v1452 = vunpack.c.h.b16 %v1420
    %v1453 = vunpack.c.l.b16 %v1421
    %v1454 = vunpack.c.h.b16 %v1421
    %v1455 = vunpack.c.l.b16 %v1422
    %v1456 = vunpack.c.h.b16 %v1422
    %v1457 = vunpack.c.l.b16 %v1423
    %v1458 = vunpack.c.h.b16 %v1423
    %v1459 = vunpack.c.l.b16 %v1424
    %v1460 = vunpack.c.h.b16 %v1424
    %v1461 = vunpack.c.l.b16 %v1425
    %v1462 = vunpack.c.h.b16 %v1425
    %v1463 = vunpack.c.l.b16 %v1426
    %v1464 = vunpack.c.h.b16 %v1426
    %v1465 = vunpack.c.l.b16 %v1427
    %v1466 = vunpack.c.h.b16 %v1427
    %v1467 = vpack.c.b16 %v1449, %v1443
    %v1468 = vpack.c.b16 %v1450, %v1444
    %v1469 = vpack.c.b16 %v1451, %v1445
    %v1470 = vpack.c.b16 %v1452, %v1446
    %v1471 = vpack.c.b16 %v1453, %v1447
    %v1472 = vpack.c.b16 %v1454, %v1448
    %v1473 = vpack.c.b16 %v1461, %v1455
    %v1474 = vpack.c.b16 %v1462, %v1456
    %v1475 = vpack.c.b16 %v1463, %v1457
    %v1476 = vpack.c.b16 %v1464, %v1458
    %v1477 = vpack.c.b16 %v1465, %v1459
    %v1478 = vpack.c.b16 %v1466, %v1460
    %v1492 = vsel %vm191, %v1430, 0
    %1494 = vmatpush.bf16.msra.mxu0 0
    %1495 = vmatpush.bf16.msra.mxu0 0
    %1496 = vmatpush.bf16.msra.mxu0 0
    %1497 = vmatpush.bf16.msra.mxu0 0
    %1498 = vmatpush.bf16.msra.mxu0 0
    %1499 = vmatpush.bf16.msra.mxu0 0
    %1500 = vmatpush.bf16.msra.mxu0 %v1473
    %1501 = vmatpush.bf16.msra.mxu0 %v1467
    %1502 = vmatmul.bf16.gmra.mxu0 %v1492
    %v1503 = vpop.f32.mrf.mxu0
    %v1504 = vadd.f32 0.0, %v1503
    %v1505 = vpop.f32.mrf.mxu0
    %1506 = vdwg.mxu0
    %1507 = vmatpush.bf16.msra.mxu0 0
    %1508 = vmatpush.bf16.msra.mxu0 0
    %1509 = vmatpush.bf16.msra.mxu0 0
    %1510 = vmatpush.bf16.msra.mxu0 0
    %1511 = vmatpush.bf16.msra.mxu0 0
    %1512 = vmatpush.bf16.msra.mxu0 0
    %1513 = vmatpush.bf16.msra.mxu0 %v1474
    %1514 = vmatpush.bf16.msra.mxu0 %v1468
    %1515 = vmatmul.bf16.gmra.mxu0 %v1492
    %v1516 = vpop.f32.mrf.mxu0
    %v1517 = vadd.f32 0.0, %v1516
    %v1518 = vpop.f32.mrf.mxu0
    %1519 = vdwg.mxu0
    %1520 = vmatpush.bf16.msra.mxu0 0
    %1521 = vmatpush.bf16.msra.mxu0 0
    %1522 = vmatpush.bf16.msra.mxu0 0
    %1523 = vmatpush.bf16.msra.mxu0 0
    %1524 = vmatpush.bf16.msra.mxu0 0
    %1525 = vmatpush.bf16.msra.mxu0 0
    %1526 = vmatpush.bf16.msra.mxu0 %v1475
    %1527 = vmatpush.bf16.msra.mxu0 %v1469
    %1528 = vmatmul.bf16.gmra.mxu0 %v1492
    %v1529 = vpop.f32.mrf.mxu0
    %v1530 = vadd.f32 0.0, %v1529
    %v1531 = vpop.f32.mrf.mxu0
    %1532 = vdwg.mxu0
    %1533 = vmatpush.bf16.msra.mxu0 0
    %1534 = vmatpush.bf16.msra.mxu0 0
    %1535 = vmatpush.bf16.msra.mxu0 0
    %1536 = vmatpush.bf16.msra.mxu0 0
    %1537 = vmatpush.bf16.msra.mxu0 0
    %1538 = vmatpush.bf16.msra.mxu0 0
    %1539 = vmatpush.bf16.msra.mxu0 %v1476
    %1540 = vmatpush.bf16.msra.mxu0 %v1470
    %1541 = vmatmul.bf16.gmra.mxu0 %v1492
    %v1542 = vpop.f32.mrf.mxu0
    %v1543 = vadd.f32 0.0, %v1542
    %v1544 = vpop.f32.mrf.mxu0
    %1545 = vdwg.mxu0
    %1546 = vmatpush.bf16.msra.mxu0 0
    %1547 = vmatpush.bf16.msra.mxu0 0
    %1548 = vmatpush.bf16.msra.mxu0 0
    %1549 = vmatpush.bf16.msra.mxu0 0
    %1550 = vmatpush.bf16.msra.mxu0 0
    %1551 = vmatpush.bf16.msra.mxu0 0
    %1552 = vmatpush.bf16.msra.mxu0 %v1477
    %1553 = vmatpush.bf16.msra.mxu0 %v1471
    %1554 = vmatmul.bf16.gmra.mxu0 %v1492
    %v1555 = vpop.f32.mrf.mxu0
    %v1556 = vadd.f32 0.0, %v1555
    %v1557 = vpop.f32.mrf.mxu0
    %1558 = vdwg.mxu0
    %1559 = vmatpush.bf16.msra.mxu0 0
    %1560 = vmatpush.bf16.msra.mxu0 0
    %1561 = vmatpush.bf16.msra.mxu0 0
    %1562 = vmatpush.bf16.msra.mxu0 0
    %1563 = vmatpush.bf16.msra.mxu0 0
    %1564 = vmatpush.bf16.msra.mxu0 0
    %1565 = vmatpush.bf16.msra.mxu0 %v1478
    %1566 = vmatpush.bf16.msra.mxu0 %v1472
    %1567 = vmatmul.bf16.gmra.mxu0 %v1492
    %v1568 = vpop.f32.mrf.mxu0
    %v1569 = vadd.f32 0.0, %v1568
    %v1570 = vpop.f32.mrf.mxu0
    %1571 = vdwg.mxu0
    %v1572 = vadd.f32 %v1302, %v1504
    %v1573 = vadd.f32 %v1303, %v1517
    %v1574 = vadd.f32 %v1304, %v1530
    %v1575 = vadd.f32 %v1305, %v1543
    %v1576 = vadd.f32 %v1306, %v1556
    %v1577 = vadd.f32 %v1307, %v1569
    %1579 = vrot.lane.b32.xlu0 %v1370, 64
    %v1580 = vpop.permute.xlu0 %1579
    %1583 = vrot.lane.b32.xlu0 %v1414, 96
    %v1584 = vpop.permute.xlu0 %1583
    %v1586 = vsel %vm191, %v1580, %v1584
    %v1587 = vpack.c.bf16 %v1586, %v1586
    %v1589 = vsel %vm369, %v1587, 0
    %1591 = vmatpush.bf16.msra.mxu0 0
    %1592 = vmatpush.bf16.msra.mxu0 0
    %1593 = vmatpush.bf16.msra.mxu0 0
    %1594 = vmatpush.bf16.msra.mxu0 0
    %1595 = vmatpush.bf16.msra.mxu0 %v359
    %1596 = vmatpush.bf16.msra.mxu0 %v357
    %1597 = vmatpush.bf16.msra.mxu0 %v355
    %1598 = vmatpush.bf16.msra.mxu0 %v353
    %1599 = vmatmul.bf16.gmra.mxu0 %v1589
    %v1600 = vpop.f32.mrf.mxu0
    %v1601 = vadd.f32 0.0, %v1600
    %v1602 = vpop.f32.mrf.mxu0
    %1603 = vdwg.mxu0
    %1604 = vmatpush.bf16.msra.mxu0 0
    %1605 = vmatpush.bf16.msra.mxu0 0
    %1606 = vmatpush.bf16.msra.mxu0 0
    %1607 = vmatpush.bf16.msra.mxu0 0
    %1608 = vmatpush.bf16.msra.mxu0 %v360
    %1609 = vmatpush.bf16.msra.mxu0 %v358
    %1610 = vmatpush.bf16.msra.mxu0 %v356
    %1611 = vmatpush.bf16.msra.mxu0 %v354
    %1612 = vmatmul.bf16.gmra.mxu0 %v1589
    %v1613 = vpop.f32.mrf.mxu0
    %v1614 = vadd.f32 0.0, %v1613
    %v1615 = vpop.f32.mrf.mxu0
    %1616 = vdwg.mxu0
    %v1617 = vadd.f32 %v205, %v1601
    %v1618 = vsub.f32 0.0, %v1617
    %v1619 = vmul.f32 %v1618, 1.442695
    %v1620 = vpow.pop %v1619
    %v1621 = vadd.f32 %v1620, 1.0
    %v1622 = vrcp.pop %v1621
    %v1623 = vtanh.pop %v1617
    %v1624 = vmul.f32 %v1622, %v1364
    %1626 = vrot.lane.b32.xlu0 %v1623, 32
    %v1627 = vpop.permute.xlu0 %1626
    %v1629 = vmul.f32 %v1622, %v1627
    %1631 = vrot.lane.b32.xlu0 %v1629, 32
    %v1632 = vpop.permute.xlu0 %1631
    %v1634 = vadd.f32 %v1624, %v1632
    %v1635 = vtanh.pop %v1634
    %1637 = vrot.lane.b32.xlu0 %v1635, 32
    %v1638 = vpop.permute.xlu0 %1637
    %v1640 = vmul.f32 %v1622, %v1638
    %v1641 = vpack.c.bf16 %v1640, %v1640
    %1643 = vrot.lane.b32.xlu0 %v1641, 64
    %v1644 = vpop.permute.xlu0 %1643
    %v1646 = vsel %vm191, %v1644, 0
    %1648 = vmatpush.bf16.msra.mxu0 0
    %1649 = vmatpush.bf16.msra.mxu0 0
    %1650 = vmatpush.bf16.msra.mxu0 0
    %1651 = vmatpush.bf16.msra.mxu0 0
    %1652 = vmatpush.bf16.msra.mxu0 0
    %1653 = vmatpush.bf16.msra.mxu0 0
    %1654 = vmatpush.bf16.msra.mxu0 %v260
    %1655 = vmatpush.bf16.msra.mxu0 %v259
    %1656 = vmatmul.bf16.gmra.mxu0 %v1646
    %v1657 = vpop.f32.mrf.mxu0
    %v1658 = vadd.f32 %v1614, %v1657
    %v1659 = vpop.f32.mrf.mxu0
    %1660 = vdwg.mxu0
    %v1661 = vadd.f32 %v1658, %v246
    %v1662 = vsub.f32 0.0, %v1661
    %v1663 = vmul.f32 %v1662, 1.442695
    %v1664 = vpow.pop %v1663
    %v1665 = vadd.f32 %v1664, 1.0
    %v1666 = vrcp.pop %v1665
    %v1667 = vtanh.pop %v1661
    %v1668 = vmul.f32 %v1666, %v1408
    %1670 = vrot.lane.b32.xlu0 %v1667, 32
    %v1671 = vpop.permute.xlu0 %1670
    %v1673 = vmul.f32 %v1666, %v1671
    %1675 = vrot.lane.b32.xlu0 %v1673, 32
    %v1676 = vpop.permute.xlu0 %1675
    %v1678 = vadd.f32 %v1668, %v1676
    %v1679 = vtanh.pop %v1678
    %1681 = vrot.lane.b32.xlu0 %v1679, 32
    %v1682 = vpop.permute.xlu0 %1681
    %v1684 = vmul.f32 %v1666, %v1682
    %v1685 = vpack.c.bf16 %v1684, %v1684
    %v1686 = vld [vmem:[#allocation2 + $0x1e0] sm:$0xff]
    %v1687 = vld [vmem:[#allocation2 + $0x1e8] sm:$0xff]
    %v1688 = vld [vmem:[#allocation2 + $0x1f0] sm:$0xff]
    %v1689 = vld [vmem:[#allocation2 + $0x1f8] sm:$0xff]
    %v1690 = vld [vmem:[#allocation2 + $0x200] sm:$0xff]
    %v1691 = vld [vmem:[#allocation2 + $0x208] sm:$0xff]
    %v1692 = vld [vmem:[#allocation2 + $0x210] sm:$0xff]
    %v1693 = vld [vmem:[#allocation2 + $0x218] sm:$0xff]
    %v1694 = vld [vmem:[#allocation2 + $0x220] sm:$0xff]
    %v1695 = vld [vmem:[#allocation2 + $0x228] sm:$0xff]
    %v1696 = vld [vmem:[#allocation2 + $0x230] sm:$0xff]
    %v1697 = vld [vmem:[#allocation2 + $0x238] sm:$0xff]
    %1699 = vrot.lane.b32.xlu0 %v1685, 64
    %v1700 = vpop.permute.xlu0 %1699
    %v1713 = vunpack.c.l.b16 %v1686
    %v1714 = vunpack.c.h.b16 %v1686
    %v1715 = vunpack.c.l.b16 %v1687
    %v1716 = vunpack.c.h.b16 %v1687
    %v1717 = vunpack.c.l.b16 %v1688
    %v1718 = vunpack.c.h.b16 %v1688
    %v1719 = vunpack.c.l.b16 %v1689
    %v1720 = vunpack.c.h.b16 %v1689
    %v1721 = vunpack.c.l.b16 %v1690
    %v1722 = vunpack.c.h.b16 %v1690
    %v1723 = vunpack.c.l.b16 %v1691
    %v1724 = vunpack.c.h.b16 %v1691
    %v1725 = vunpack.c.l.b16 %v1692
    %v1726 = vunpack.c.h.b16 %v1692
    %v1727 = vunpack.c.l.b16 %v1693
    %v1728 = vunpack.c.h.b16 %v1693
    %v1729 = vunpack.c.l.b16 %v1694
    %v1730 = vunpack.c.h.b16 %v1694
    %v1731 = vunpack.c.l.b16 %v1695
    %v1732 = vunpack.c.h.b16 %v1695
    %v1733 = vunpack.c.l.b16 %v1696
    %v1734 = vunpack.c.h.b16 %v1696
    %v1735 = vunpack.c.l.b16 %v1697
    %v1736 = vunpack.c.h.b16 %v1697
    %v1737 = vpack.c.b16 %v1719, %v1713
    %v1738 = vpack.c.b16 %v1720, %v1714
    %v1739 = vpack.c.b16 %v1721, %v1715
    %v1740 = vpack.c.b16 %v1722, %v1716
    %v1741 = vpack.c.b16 %v1723, %v1717
    %v1742 = vpack.c.b16 %v1724, %v1718
    %v1743 = vpack.c.b16 %v1731, %v1725
    %v1744 = vpack.c.b16 %v1732, %v1726
    %v1745 = vpack.c.b16 %v1733, %v1727
    %v1746 = vpack.c.b16 %v1734, %v1728
    %v1747 = vpack.c.b16 %v1735, %v1729
    %v1748 = vpack.c.b16 %v1736, %v1730
    %v1762 = vsel %vm191, %v1700, 0
    %1764 = vmatpush.bf16.msra.mxu0 0
    %1765 = vmatpush.bf16.msra.mxu0 0
    %1766 = vmatpush.bf16.msra.mxu0 0
    %1767 = vmatpush.bf16.msra.mxu0 0
    %1768 = vmatpush.bf16.msra.mxu0 0
    %1769 = vmatpush.bf16.msra.mxu0 0
    %1770 = vmatpush.bf16.msra.mxu0 %v1743
    %1771 = vmatpush.bf16.msra.mxu0 %v1737
    %1772 = vmatmul.bf16.gmra.mxu0 %v1762
    %v1773 = vpop.f32.mrf.mxu0
    %v1774 = vadd.f32 0.0, %v1773
    %v1775 = vpop.f32.mrf.mxu0
    %1776 = vdwg.mxu0
    %1777 = vmatpush.bf16.msra.mxu0 0
    %1778 = vmatpush.bf16.msra.mxu0 0
    %1779 = vmatpush.bf16.msra.mxu0 0
    %1780 = vmatpush.bf16.msra.mxu0 0
    %1781 = vmatpush.bf16.msra.mxu0 0
    %1782 = vmatpush.bf16.msra.mxu0 0
    %1783 = vmatpush.bf16.msra.mxu0 %v1744
    %1784 = vmatpush.bf16.msra.mxu0 %v1738
    %1785 = vmatmul.bf16.gmra.mxu0 %v1762
    %v1786 = vpop.f32.mrf.mxu0
    %v1787 = vadd.f32 0.0, %v1786
    %v1788 = vpop.f32.mrf.mxu0
    %1789 = vdwg.mxu0
    %1790 = vmatpush.bf16.msra.mxu0 0
    %1791 = vmatpush.bf16.msra.mxu0 0
    %1792 = vmatpush.bf16.msra.mxu0 0
    %1793 = vmatpush.bf16.msra.mxu0 0
    %1794 = vmatpush.bf16.msra.mxu0 0
    %1795 = vmatpush.bf16.msra.mxu0 0
    %1796 = vmatpush.bf16.msra.mxu0 %v1745
    %1797 = vmatpush.bf16.msra.mxu0 %v1739
    %1798 = vmatmul.bf16.gmra.mxu0 %v1762
    %v1799 = vpop.f32.mrf.mxu0
    %v1800 = vadd.f32 0.0, %v1799
    %v1801 = vpop.f32.mrf.mxu0
    %1802 = vdwg.mxu0
    %1803 = vmatpush.bf16.msra.mxu0 0
    %1804 = vmatpush.bf16.msra.mxu0 0
    %1805 = vmatpush.bf16.msra.mxu0 0
    %1806 = vmatpush.bf16.msra.mxu0 0
    %1807 = vmatpush.bf16.msra.mxu0 0
    %1808 = vmatpush.bf16.msra.mxu0 0
    %1809 = vmatpush.bf16.msra.mxu0 %v1746
    %1810 = vmatpush.bf16.msra.mxu0 %v1740
    %1811 = vmatmul.bf16.gmra.mxu0 %v1762
    %v1812 = vpop.f32.mrf.mxu0
    %v1813 = vadd.f32 0.0, %v1812
    %v1814 = vpop.f32.mrf.mxu0
    %1815 = vdwg.mxu0
    %1816 = vmatpush.bf16.msra.mxu0 0
    %1817 = vmatpush.bf16.msra.mxu0 0
    %1818 = vmatpush.bf16.msra.mxu0 0
    %1819 = vmatpush.bf16.msra.mxu0 0
    %1820 = vmatpush.bf16.msra.mxu0 0
    %1821 = vmatpush.bf16.msra.mxu0 0
    %1822 = vmatpush.bf16.msra.mxu0 %v1747
    %1823 = vmatpush.bf16.msra.mxu0 %v1741
    %1824 = vmatmul.bf16.gmra.mxu0 %v1762
    %v1825 = vpop.f32.mrf.mxu0
    %v1826 = vadd.f32 0.0, %v1825
    %v1827 = vpop.f32.mrf.mxu0
    %1828 = vdwg.mxu0
    %1829 = vmatpush.bf16.msra.mxu0 0
    %1830 = vmatpush.bf16.msra.mxu0 0
    %1831 = vmatpush.bf16.msra.mxu0 0
    %1832 = vmatpush.bf16.msra.mxu0 0
    %1833 = vmatpush.bf16.msra.mxu0 0
    %1834 = vmatpush.bf16.msra.mxu0 0
    %1835 = vmatpush.bf16.msra.mxu0 %v1748
    %1836 = vmatpush.bf16.msra.mxu0 %v1742
    %1837 = vmatmul.bf16.gmra.mxu0 %v1762
    %v1838 = vpop.f32.mrf.mxu0
    %v1839 = vadd.f32 0.0, %v1838
    %v1840 = vpop.f32.mrf.mxu0
    %1841 = vdwg.mxu0
    %v1842 = vadd.f32 %v1572, %v1774
    %v1843 = vadd.f32 %v1573, %v1787
    %v1844 = vadd.f32 %v1574, %v1800
    %v1845 = vadd.f32 %v1575, %v1813
    %v1846 = vadd.f32 %v1576, %v1826
    %v1847 = vadd.f32 %v1577, %v1839
    %1849 = vrot.lane.b32.xlu0 %v1640, 64
    %v1850 = vpop.permute.xlu0 %1849
    %1853 = vrot.lane.b32.xlu0 %v1684, 96
    %v1854 = vpop.permute.xlu0 %1853
    %v1856 = vsel %vm191, %v1850, %v1854
    %v1857 = vpack.c.bf16 %v1856, %v1856
    %v1859 = vsel %vm369, %v1857, 0
    %1861 = vmatpush.bf16.msra.mxu0 0
    %1862 = vmatpush.bf16.msra.mxu0 0
    %1863 = vmatpush.bf16.msra.mxu0 0
    %1864 = vmatpush.bf16.msra.mxu0 0
    %1865 = vmatpush.bf16.msra.mxu0 %v359
    %1866 = vmatpush.bf16.msra.mxu0 %v357
    %1867 = vmatpush.bf16.msra.mxu0 %v355
    %1868 = vmatpush.bf16.msra.mxu0 %v353
    %1869 = vmatmul.bf16.gmra.mxu0 %v1859
    %v1870 = vpop.f32.mrf.mxu0
    %v1871 = vadd.f32 0.0, %v1870
    %v1872 = vpop.f32.mrf.mxu0
    %1873 = vdwg.mxu0
    %1874 = vmatpush.bf16.msra.mxu0 0
    %1875 = vmatpush.bf16.msra.mxu0 0
    %1876 = vmatpush.bf16.msra.mxu0 0
    %1877 = vmatpush.bf16.msra.mxu0 0
    %1878 = vmatpush.bf16.msra.mxu0 %v360
    %1879 = vmatpush.bf16.msra.mxu0 %v358
    %1880 = vmatpush.bf16.msra.mxu0 %v356
    %1881 = vmatpush.bf16.msra.mxu0 %v354
    %1882 = vmatmul.bf16.gmra.mxu0 %v1859
    %v1883 = vpop.f32.mrf.mxu0
    %v1884 = vadd.f32 0.0, %v1883
    %v1885 = vpop.f32.mrf.mxu0
    %1886 = vdwg.mxu0
    %v1887 = vadd.f32 %v205, %v1871
    %v1888 = vsub.f32 0.0, %v1887
    %v1889 = vmul.f32 %v1888, 1.442695
    %v1890 = vpow.pop %v1889
    %v1891 = vadd.f32 %v1890, 1.0
    %v1892 = vrcp.pop %v1891
    %v1893 = vtanh.pop %v1887
    %v1894 = vmul.f32 %v1892, %v1634
    %1896 = vrot.lane.b32.xlu0 %v1893, 32
    %v1897 = vpop.permute.xlu0 %1896
    %v1899 = vmul.f32 %v1892, %v1897
    %1901 = vrot.lane.b32.xlu0 %v1899, 32
    %v1902 = vpop.permute.xlu0 %1901
    %v1904 = vadd.f32 %v1894, %v1902
    %v1905 = vtanh.pop %v1904
    %1907 = vrot.lane.b32.xlu0 %v1905, 32
    %v1908 = vpop.permute.xlu0 %1907
    %v1910 = vmul.f32 %v1892, %v1908
    %v1911 = vpack.c.bf16 %v1910, %v1910
    %1913 = vrot.lane.b32.xlu0 %v1911, 64
    %v1914 = vpop.permute.xlu0 %1913
    %v1916 = vsel %vm191, %v1914, 0
    %1918 = vmatpush.bf16.msra.mxu0 0
    %1919 = vmatpush.bf16.msra.mxu0 0
    %1920 = vmatpush.bf16.msra.mxu0 0
    %1921 = vmatpush.bf16.msra.mxu0 0
    %1922 = vmatpush.bf16.msra.mxu0 0
    %1923 = vmatpush.bf16.msra.mxu0 0
    %1924 = vmatpush.bf16.msra.mxu0 %v260
    %1925 = vmatpush.bf16.msra.mxu0 %v259
    %1926 = vmatmul.bf16.gmra.mxu0 %v1916
    %v1927 = vpop.f32.mrf.mxu0
    %v1928 = vadd.f32 %v1884, %v1927
    %v1929 = vpop.f32.mrf.mxu0
    %1930 = vdwg.mxu0
    %v1931 = vadd.f32 %v1928, %v246
    %v1932 = vsub.f32 0.0, %v1931
    %v1933 = vmul.f32 %v1932, 1.442695
    %v1934 = vpow.pop %v1933
    %v1935 = vadd.f32 %v1934, 1.0
    %v1936 = vrcp.pop %v1935
    %v1937 = vtanh.pop %v1931
    %v1938 = vmul.f32 %v1936, %v1678
    %1940 = vrot.lane.b32.xlu0 %v1937, 32
    %v1941 = vpop.permute.xlu0 %1940
    %v1943 = vmul.f32 %v1936, %v1941
    %1945 = vrot.lane.b32.xlu0 %v1943, 32
    %v1946 = vpop.permute.xlu0 %1945
    %v1948 = vadd.f32 %v1938, %v1946
    %v1949 = vtanh.pop %v1948
    %1951 = vrot.lane.b32.xlu0 %v1949, 32
    %v1952 = vpop.permute.xlu0 %1951
    %v1954 = vmul.f32 %v1936, %v1952
    %v1955 = vpack.c.bf16 %v1954, %v1954
    %v1956 = vld [vmem:[#allocation2 + $0x240] sm:$0xff]
    %v1957 = vld [vmem:[#allocation2 + $0x248] sm:$0xff]
    %v1958 = vld [vmem:[#allocation2 + $0x250] sm:$0xff]
    %v1959 = vld [vmem:[#allocation2 + $0x258] sm:$0xff]
    %v1960 = vld [vmem:[#allocation2 + $0x260] sm:$0xff]
    %v1961 = vld [vmem:[#allocation2 + $0x268] sm:$0xff]
    %v1962 = vld [vmem:[#allocation2 + $0x270] sm:$0xff]
    %v1963 = vld [vmem:[#allocation2 + $0x278] sm:$0xff]
    %v1964 = vld [vmem:[#allocation2 + $0x280] sm:$0xff]
    %v1965 = vld [vmem:[#allocation2 + $0x288] sm:$0xff]
    %v1966 = vld [vmem:[#allocation2 + $0x290] sm:$0xff]
    %v1967 = vld [vmem:[#allocation2 + $0x298] sm:$0xff]
    %1969 = vrot.lane.b32.xlu0 %v1955, 64
    %v1970 = vpop.permute.xlu0 %1969
    %v1983 = vunpack.c.l.b16 %v1956
    %v1984 = vunpack.c.h.b16 %v1956
    %v1985 = vunpack.c.l.b16 %v1957
    %v1986 = vunpack.c.h.b16 %v1957
    %v1987 = vunpack.c.l.b16 %v1958
    %v1988 = vunpack.c.h.b16 %v1958
    %v1989 = vunpack.c.l.b16 %v1959
    %v1990 = vunpack.c.h.b16 %v1959
    %v1991 = vunpack.c.l.b16 %v1960
    %v1992 = vunpack.c.h.b16 %v1960
    %v1993 = vunpack.c.l.b16 %v1961
    %v1994 = vunpack.c.h.b16 %v1961
    %v1995 = vunpack.c.l.b16 %v1962
    %v1996 = vunpack.c.h.b16 %v1962
    %v1997 = vunpack.c.l.b16 %v1963
    %v1998 = vunpack.c.h.b16 %v1963
    %v1999 = vunpack.c.l.b16 %v1964
    %v2000 = vunpack.c.h.b16 %v1964
    %v2001 = vunpack.c.l.b16 %v1965
    %v2002 = vunpack.c.h.b16 %v1965
    %v2003 = vunpack.c.l.b16 %v1966
    %v2004 = vunpack.c.h.b16 %v1966
    %v2005 = vunpack.c.l.b16 %v1967
    %v2006 = vunpack.c.h.b16 %v1967
    %v2007 = vpack.c.b16 %v1989, %v1983
    %v2008 = vpack.c.b16 %v1990, %v1984
    %v2009 = vpack.c.b16 %v1991, %v1985
    %v2010 = vpack.c.b16 %v1992, %v1986
    %v2011 = vpack.c.b16 %v1993, %v1987
    %v2012 = vpack.c.b16 %v1994, %v1988
    %v2013 = vpack.c.b16 %v2001, %v1995
    %v2014 = vpack.c.b16 %v2002, %v1996
    %v2015 = vpack.c.b16 %v2003, %v1997
    %v2016 = vpack.c.b16 %v2004, %v1998
    %v2017 = vpack.c.b16 %v2005, %v1999
    %v2018 = vpack.c.b16 %v2006, %v2000
    %v2032 = vsel %vm191, %v1970, 0
    %2034 = vmatpush.bf16.msra.mxu0 0
    %2035 = vmatpush.bf16.msra.mxu0 0
    %2036 = vmatpush.bf16.msra.mxu0 0
    %2037 = vmatpush.bf16.msra.mxu0 0
    %2038 = vmatpush.bf16.msra.mxu0 0
    %2039 = vmatpush.bf16.msra.mxu0 0
    %2040 = vmatpush.bf16.msra.mxu0 %v2013
    %2041 = vmatpush.bf16.msra.mxu0 %v2007
    %2042 = vmatmul.bf16.gmra.mxu0 %v2032
    %v2043 = vpop.f32.mrf.mxu0
    %v2044 = vadd.f32 0.0, %v2043
    %v2045 = vpop.f32.mrf.mxu0
    %2046 = vdwg.mxu0
    %2047 = vmatpush.bf16.msra.mxu0 0
    %2048 = vmatpush.bf16.msra.mxu0 0
    %2049 = vmatpush.bf16.msra.mxu0 0
    %2050 = vmatpush.bf16.msra.mxu0 0
    %2051 = vmatpush.bf16.msra.mxu0 0
    %2052 = vmatpush.bf16.msra.mxu0 0
    %2053 = vmatpush.bf16.msra.mxu0 %v2014
    %2054 = vmatpush.bf16.msra.mxu0 %v2008
    %2055 = vmatmul.bf16.gmra.mxu0 %v2032
    %v2056 = vpop.f32.mrf.mxu0
    %v2057 = vadd.f32 0.0, %v2056
    %v2058 = vpop.f32.mrf.mxu0
    %2059 = vdwg.mxu0
    %2060 = vmatpush.bf16.msra.mxu0 0
    %2061 = vmatpush.bf16.msra.mxu0 0
    %2062 = vmatpush.bf16.msra.mxu0 0
    %2063 = vmatpush.bf16.msra.mxu0 0
    %2064 = vmatpush.bf16.msra.mxu0 0
    %2065 = vmatpush.bf16.msra.mxu0 0
    %2066 = vmatpush.bf16.msra.mxu0 %v2015
    %2067 = vmatpush.bf16.msra.mxu0 %v2009
    %2068 = vmatmul.bf16.gmra.mxu0 %v2032
    %v2069 = vpop.f32.mrf.mxu0
    %v2070 = vadd.f32 0.0, %v2069
    %v2071 = vpop.f32.mrf.mxu0
    %2072 = vdwg.mxu0
    %2073 = vmatpush.bf16.msra.mxu0 0
    %2074 = vmatpush.bf16.msra.mxu0 0
    %2075 = vmatpush.bf16.msra.mxu0 0
    %2076 = vmatpush.bf16.msra.mxu0 0
    %2077 = vmatpush.bf16.msra.mxu0 0
    %2078 = vmatpush.bf16.msra.mxu0 0
    %2079 = vmatpush.bf16.msra.mxu0 %v2016
    %2080 = vmatpush.bf16.msra.mxu0 %v2010
    %2081 = vmatmul.bf16.gmra.mxu0 %v2032
    %v2082 = vpop.f32.mrf.mxu0
    %v2083 = vadd.f32 0.0, %v2082
    %v2084 = vpop.f32.mrf.mxu0
    %2085 = vdwg.mxu0
    %2086 = vmatpush.bf16.msra.mxu0 0
    %2087 = vmatpush.bf16.msra.mxu0 0
    %2088 = vmatpush.bf16.msra.mxu0 0
    %2089 = vmatpush.bf16.msra.mxu0 0
    %2090 = vmatpush.bf16.msra.mxu0 0
    %2091 = vmatpush.bf16.msra.mxu0 0
    %2092 = vmatpush.bf16.msra.mxu0 %v2017
    %2093 = vmatpush.bf16.msra.mxu0 %v2011
    %2094 = vmatmul.bf16.gmra.mxu0 %v2032
    %v2095 = vpop.f32.mrf.mxu0
    %v2096 = vadd.f32 0.0, %v2095
    %v2097 = vpop.f32.mrf.mxu0
    %2098 = vdwg.mxu0
    %2099 = vmatpush.bf16.msra.mxu0 0
    %2100 = vmatpush.bf16.msra.mxu0 0
    %2101 = vmatpush.bf16.msra.mxu0 0
    %2102 = vmatpush.bf16.msra.mxu0 0
    %2103 = vmatpush.bf16.msra.mxu0 0
    %2104 = vmatpush.bf16.msra.mxu0 0
    %2105 = vmatpush.bf16.msra.mxu0 %v2018
    %2106 = vmatpush.bf16.msra.mxu0 %v2012
    %2107 = vmatmul.bf16.gmra.mxu0 %v2032
    %v2108 = vpop.f32.mrf.mxu0
    %v2109 = vadd.f32 0.0, %v2108
    %v2110 = vpop.f32.mrf.mxu0
    %2111 = vdwg.mxu0
    %v2112 = vadd.f32 %v1842, %v2044
    %v2113 = vadd.f32 %v1843, %v2057
    %v2114 = vadd.f32 %v1844, %v2070
    %v2115 = vadd.f32 %v1845, %v2083
    %v2116 = vadd.f32 %v1846, %v2096
    %v2117 = vadd.f32 %v1847, %v2109
    %2119 = vrot.lane.b32.xlu0 %v1910, 64
    %v2120 = vpop.permute.xlu0 %2119
    %2123 = vrot.lane.b32.xlu0 %v1954, 96
    %v2124 = vpop.permute.xlu0 %2123
    %v2126 = vsel %vm191, %v2120, %v2124
    %v2127 = vpack.c.bf16 %v2126, %v2126
    %v2129 = vsel %vm369, %v2127, 0
    %2131 = vmatpush.bf16.msra.mxu0 0
    %2132 = vmatpush.bf16.msra.mxu0 0
    %2133 = vmatpush.bf16.msra.mxu0 0
    %2134 = vmatpush.bf16.msra.mxu0 0
    %2135 = vmatpush.bf16.msra.mxu0 %v359
    %2136 = vmatpush.bf16.msra.mxu0 %v357
    %2137 = vmatpush.bf16.msra.mxu0 %v355
    %2138 = vmatpush.bf16.msra.mxu0 %v353
    %2139 = vmatmul.bf16.gmra.mxu0 %v2129
    %v2140 = vpop.f32.mrf.mxu0
    %v2141 = vadd.f32 0.0, %v2140
    %v2142 = vpop.f32.mrf.mxu0
    %2143 = vdwg.mxu0
    %2144 = vmatpush.bf16.msra.mxu0 0
    %2145 = vmatpush.bf16.msra.mxu0 0
    %2146 = vmatpush.bf16.msra.mxu0 0
    %2147 = vmatpush.bf16.msra.mxu0 0
    %2148 = vmatpush.bf16.msra.mxu0 %v360
    %2149 = vmatpush.bf16.msra.mxu0 %v358
    %2150 = vmatpush.bf16.msra.mxu0 %v356
    %2151 = vmatpush.bf16.msra.mxu0 %v354
    %2152 = vmatmul.bf16.gmra.mxu0 %v2129
    %v2153 = vpop.f32.mrf.mxu0
    %v2154 = vadd.f32 0.0, %v2153
    %v2155 = vpop.f32.mrf.mxu0
    %2156 = vdwg.mxu0
    %v2157 = vadd.f32 %v205, %v2141
    %v2158 = vsub.f32 0.0, %v2157
    %v2159 = vmul.f32 %v2158, 1.442695
    %v2160 = vpow.pop %v2159
    %v2161 = vadd.f32 %v2160, 1.0
    %v2162 = vrcp.pop %v2161
    %v2163 = vtanh.pop %v2157
    %v2164 = vmul.f32 %v2162, %v1904
    %2166 = vrot.lane.b32.xlu0 %v2163, 32
    %v2167 = vpop.permute.xlu0 %2166
    %v2169 = vmul.f32 %v2162, %v2167
    %2171 = vrot.lane.b32.xlu0 %v2169, 32
    %v2172 = vpop.permute.xlu0 %2171
    %v2174 = vadd.f32 %v2164, %v2172
    %v2175 = vtanh.pop %v2174
    %2177 = vrot.lane.b32.xlu0 %v2175, 32
    %v2178 = vpop.permute.xlu0 %2177
    %v2180 = vmul.f32 %v2162, %v2178
    %v2181 = vpack.c.bf16 %v2180, %v2180
    %2183 = vrot.lane.b32.xlu0 %v2181, 64
    %v2184 = vpop.permute.xlu0 %2183
    %v2186 = vsel %vm191, %v2184, 0
    %2188 = vmatpush.bf16.msra.mxu0 0
    %2189 = vmatpush.bf16.msra.mxu0 0
    %2190 = vmatpush.bf16.msra.mxu0 0
    %2191 = vmatpush.bf16.msra.mxu0 0
    %2192 = vmatpush.bf16.msra.mxu0 0
    %2193 = vmatpush.bf16.msra.mxu0 0
    %2194 = vmatpush.bf16.msra.mxu0 %v260
    %2195 = vmatpush.bf16.msra.mxu0 %v259
    %2196 = vmatmul.bf16.gmra.mxu0 %v2186
    %v2197 = vpop.f32.mrf.mxu0
    %v2198 = vadd.f32 %v2154, %v2197
    %v2199 = vpop.f32.mrf.mxu0
    %2200 = vdwg.mxu0
    %v2201 = vadd.f32 %v2198, %v246
    %v2202 = vsub.f32 0.0, %v2201
    %v2203 = vmul.f32 %v2202, 1.442695
    %v2204 = vpow.pop %v2203
    %v2205 = vadd.f32 %v2204, 1.0
    %v2206 = vrcp.pop %v2205
    %v2207 = vtanh.pop %v2201
    %v2208 = vmul.f32 %v2206, %v1948
    %2210 = vrot.lane.b32.xlu0 %v2207, 32
    %v2211 = vpop.permute.xlu0 %2210
    %v2213 = vmul.f32 %v2206, %v2211
    %2215 = vrot.lane.b32.xlu0 %v2213, 32
    %v2216 = vpop.permute.xlu0 %2215
    %v2218 = vadd.f32 %v2208, %v2216
    %v2219 = vtanh.pop %v2218
    %2221 = vrot.lane.b32.xlu0 %v2219, 32
    %v2222 = vpop.permute.xlu0 %2221
    %v2224 = vmul.f32 %v2206, %v2222
    %v2225 = vpack.c.bf16 %v2224, %v2224
    %v2226 = vld [vmem:[#allocation2 + $0x2a0] sm:$0xff]
    %v2227 = vld [vmem:[#allocation2 + $0x2a8] sm:$0xff]
    %v2228 = vld [vmem:[#allocation2 + $0x2b0] sm:$0xff]
    %v2229 = vld [vmem:[#allocation2 + $0x2b8] sm:$0xff]
    %v2230 = vld [vmem:[#allocation2 + $0x2c0] sm:$0xff]
    %v2231 = vld [vmem:[#allocation2 + $0x2c8] sm:$0xff]
    %v2232 = vld [vmem:[#allocation2 + $0x2d0] sm:$0xff]
    %v2233 = vld [vmem:[#allocation2 + $0x2d8] sm:$0xff]
    %v2234 = vld [vmem:[#allocation2 + $0x2e0] sm:$0xff]
    %v2235 = vld [vmem:[#allocation2 + $0x2e8] sm:$0xff]
    %v2236 = vld [vmem:[#allocation2 + $0x2f0] sm:$0xff]
    %v2237 = vld [vmem:[#allocation2 + $0x2f8] sm:$0xff]
    %2239 = vrot.lane.b32.xlu0 %v2225, 64
    %v2240 = vpop.permute.xlu0 %2239
    %v2253 = vunpack.c.l.b16 %v2226
    %v2254 = vunpack.c.h.b16 %v2226
    %v2255 = vunpack.c.l.b16 %v2227
    %v2256 = vunpack.c.h.b16 %v2227
    %v2257 = vunpack.c.l.b16 %v2228
    %v2258 = vunpack.c.h.b16 %v2228
    %v2259 = vunpack.c.l.b16 %v2229
    %v2260 = vunpack.c.h.b16 %v2229
    %v2261 = vunpack.c.l.b16 %v2230
    %v2262 = vunpack.c.h.b16 %v2230
    %v2263 = vunpack.c.l.b16 %v2231
    %v2264 = vunpack.c.h.b16 %v2231
    %v2265 = vunpack.c.l.b16 %v2232
    %v2266 = vunpack.c.h.b16 %v2232
    %v2267 = vunpack.c.l.b16 %v2233
    %v2268 = vunpack.c.h.b16 %v2233
    %v2269 = vunpack.c.l.b16 %v2234
    %v2270 = vunpack.c.h.b16 %v2234
    %v2271 = vunpack.c.l.b16 %v2235
    %v2272 = vunpack.c.h.b16 %v2235
    %v2273 = vunpack.c.l.b16 %v2236
    %v2274 = vunpack.c.h.b16 %v2236
    %v2275 = vunpack.c.l.b16 %v2237
    %v2276 = vunpack.c.h.b16 %v2237
    %v2277 = vpack.c.b16 %v2259, %v2253
    %v2278 = vpack.c.b16 %v2260, %v2254
    %v2279 = vpack.c.b16 %v2261, %v2255
    %v2280 = vpack.c.b16 %v2262, %v2256
    %v2281 = vpack.c.b16 %v2263, %v2257
    %v2282 = vpack.c.b16 %v2264, %v2258
    %v2283 = vpack.c.b16 %v2271, %v2265
    %v2284 = vpack.c.b16 %v2272, %v2266
    %v2285 = vpack.c.b16 %v2273, %v2267
    %v2286 = vpack.c.b16 %v2274, %v2268
    %v2287 = vpack.c.b16 %v2275, %v2269
    %v2288 = vpack.c.b16 %v2276, %v2270
    %v2302 = vsel %vm191, %v2240, 0
    %2304 = vmatpush.bf16.msra.mxu0 0
    %2305 = vmatpush.bf16.msra.mxu0 0
    %2306 = vmatpush.bf16.msra.mxu0 0
    %2307 = vmatpush.bf16.msra.mxu0 0
    %2308 = vmatpush.bf16.msra.mxu0 0
    %2309 = vmatpush.bf16.msra.mxu0 0
    %2310 = vmatpush.bf16.msra.mxu0 %v2283
    %2311 = vmatpush.bf16.msra.mxu0 %v2277
    %2312 = vmatmul.bf16.gmra.mxu0 %v2302
    %v2313 = vpop.f32.mrf.mxu0
    %v2314 = vadd.f32 0.0, %v2313
    %v2315 = vpop.f32.mrf.mxu0
    %2316 = vdwg.mxu0
    %2317 = vmatpush.bf16.msra.mxu0 0
    %2318 = vmatpush.bf16.msra.mxu0 0
    %2319 = vmatpush.bf16.msra.mxu0 0
    %2320 = vmatpush.bf16.msra.mxu0 0
    %2321 = vmatpush.bf16.msra.mxu0 0
    %2322 = vmatpush.bf16.msra.mxu0 0
    %2323 = vmatpush.bf16.msra.mxu0 %v2284
    %2324 = vmatpush.bf16.msra.mxu0 %v2278
    %2325 = vmatmul.bf16.gmra.mxu0 %v2302
    %v2326 = vpop.f32.mrf.mxu0
    %v2327 = vadd.f32 0.0, %v2326
    %v2328 = vpop.f32.mrf.mxu0
    %2329 = vdwg.mxu0
    %2330 = vmatpush.bf16.msra.mxu0 0
    %2331 = vmatpush.bf16.msra.mxu0 0
    %2332 = vmatpush.bf16.msra.mxu0 0
    %2333 = vmatpush.bf16.msra.mxu0 0
    %2334 = vmatpush.bf16.msra.mxu0 0
    %2335 = vmatpush.bf16.msra.mxu0 0
    %2336 = vmatpush.bf16.msra.mxu0 %v2285
    %2337 = vmatpush.bf16.msra.mxu0 %v2279
    %2338 = vmatmul.bf16.gmra.mxu0 %v2302
    %v2339 = vpop.f32.mrf.mxu0
    %v2340 = vadd.f32 0.0, %v2339
    %v2341 = vpop.f32.mrf.mxu0
    %2342 = vdwg.mxu0
    %2343 = vmatpush.bf16.msra.mxu0 0
    %2344 = vmatpush.bf16.msra.mxu0 0
    %2345 = vmatpush.bf16.msra.mxu0 0
    %2346 = vmatpush.bf16.msra.mxu0 0
    %2347 = vmatpush.bf16.msra.mxu0 0
    %2348 = vmatpush.bf16.msra.mxu0 0
    %2349 = vmatpush.bf16.msra.mxu0 %v2286
    %2350 = vmatpush.bf16.msra.mxu0 %v2280
    %2351 = vmatmul.bf16.gmra.mxu0 %v2302
    %v2352 = vpop.f32.mrf.mxu0
    %v2353 = vadd.f32 0.0, %v2352
    %v2354 = vpop.f32.mrf.mxu0
    %2355 = vdwg.mxu0
    %2356 = vmatpush.bf16.msra.mxu0 0
    %2357 = vmatpush.bf16.msra.mxu0 0
    %2358 = vmatpush.bf16.msra.mxu0 0
    %2359 = vmatpush.bf16.msra.mxu0 0
    %2360 = vmatpush.bf16.msra.mxu0 0
    %2361 = vmatpush.bf16.msra.mxu0 0
    %2362 = vmatpush.bf16.msra.mxu0 %v2287
    %2363 = vmatpush.bf16.msra.mxu0 %v2281
    %2364 = vmatmul.bf16.gmra.mxu0 %v2302
    %v2365 = vpop.f32.mrf.mxu0
    %v2366 = vadd.f32 0.0, %v2365
    %v2367 = vpop.f32.mrf.mxu0
    %2368 = vdwg.mxu0
    %2369 = vmatpush.bf16.msra.mxu0 0
    %2370 = vmatpush.bf16.msra.mxu0 0
    %2371 = vmatpush.bf16.msra.mxu0 0
    %2372 = vmatpush.bf16.msra.mxu0 0
    %2373 = vmatpush.bf16.msra.mxu0 0
    %2374 = vmatpush.bf16.msra.mxu0 0
    %2375 = vmatpush.bf16.msra.mxu0 %v2288
    %2376 = vmatpush.bf16.msra.mxu0 %v2282
    %2377 = vmatmul.bf16.gmra.mxu0 %v2302
    %v2378 = vpop.f32.mrf.mxu0
    %v2379 = vadd.f32 0.0, %v2378
    %v2380 = vpop.f32.mrf.mxu0
    %2381 = vdwg.mxu0
    %v2382 = vadd.f32 %v2112, %v2314
    %v2383 = vadd.f32 %v2113, %v2327
    %v2384 = vadd.f32 %v2114, %v2340
    %v2385 = vadd.f32 %v2115, %v2353
    %v2386 = vadd.f32 %v2116, %v2366
    %v2387 = vadd.f32 %v2117, %v2379
    %v2388 = vld [vmem:[%s9] sm:$0x3f]
    %v2390 = vperm.slane %v2388, 0
    %v2391 = vperm.slane %v2388, 1
    %v2392 = vperm.slane %v2388, 2
    %v2393 = vperm.slane %v2388, 3
    %v2394 = vperm.slane %v2388, 4
    %v2395 = vperm.slane %v2388, 5
    %v2402 = vadd.f32 %v2382, %v2390
    %v2403 = vadd.f32 %v2383, %v2391
    %v2404 = vadd.f32 %v2384, %v2392
    %v2405 = vadd.f32 %v2385, %v2393
    %v2406 = vadd.f32 %v2386, %v2394
    %v2407 = vadd.f32 %v2387, %v2395
    %v2414 = vrot.slane %v2403, 6
    %v2415 = vrot.slane %v2404, 4
    %v2416 = vrot.slane %v2405, 2
    %v2417 = vrot.slane %v2407, 6
    %vm2418 = vcmask 1041408
    %v2419 = vsel %vm2418, %v2402, %v2414
    %vm2420 = vcmask 1045508
    %v2421 = vsel %vm2420, %v2415, %v2416
    %vm2422 = vcmask 1043456
    %v2423 = vsel %vm2422, %v2419, %v2421
    %v2424 = vsel %vm2418, %v2406, %v2417
    %2427 = vst [vmem:[#allocation15] sm:$0xff] %v2423
    %2428 = vst [vmem:[#allocation15 + $0x8] sm:$0xf] %v2424
    // Predicated region
    $region66: #{tpu_custom_call.1} parent=1 // pred_check
      _
    $region67: #{tpu_custom_call.1} parent=1 // pred_check_branch
      %2430 = sbr.rel (0) target = $region69
    $region68: #{tpu_custom_call.1} parent=1 // pred_region
      %2432 = vsyncadd [#allocation6], 0
      %s2434 = sshll.u32 [#allocation15], 4
      %s2435 = int_to_ptr.vmem [resolvable:$true] %s2434
      %s2436 = sshll.u32 %s10, 4
      %s2437 = int_to_ptr.hbm [resolvable:$true] %s2436
      %2439 = dma.vmem_to_hbm [thread:$0]  %s2435, 192, %s2437, [#allocation6]
    $region69: #{tpu_custom_call.1} parent=1 // pred_fallthru
      _
    // Predicated region
    $region70: #{tpu_custom_call.1} parent=1 // pred_check
      _
    $region71: #{tpu_custom_call.1} parent=1 // pred_check_branch
      %2441 = sbr.rel (0) target = $region73
    $region72: #{tpu_custom_call.1} parent=1 // pred_region
      %2443 = dma.done [#allocation6], 192
    $region73: #{tpu_custom_call.1} parent=1 // pred_fallthru
      _
    %2444 = vsyncpa [#allocation5], 1
    %2445 = vsyncpa [#allocation8], 1
    %2446 = vsyncpa [#allocation11], 1
    %2447 = vsyncpa [#allocation14], 1
    %2448 = vsyncpa [#allocation6], 1
  %2449 = vsyncmov [#allocation3]
  %s2450 = vpop.sfrf %2449
  %p2451 = scmp.eq.s32.totalorder %s2450, 0
  %p2452 = pneg %p2451
  %2454 = shalt.err (%p2452)

</llo_original>
